<compile_context>
chip_gen: v7x
topology: tpu7x:2x2x1
jax: 0.10.0
libtpu: 0.0.40
codegen_flags: <defaults>
</compile_context>

<pallas_src>
import jax
import jax.numpy as jnp
from jax.experimental import pallas as pl
from jax.experimental.pallas import tpu as pltpu


def mednext_block(x, params, kernel_size=7):
    """x: (N, C, H, W) float32 (NCHW, like PyTorch). Returns (N, C, H, W)."""
    N, C, H, W = x.shape
    K = kernel_size
    pad = K // 2
    Cexp = int(params["conv2_w"].shape[0])
    Cout = int(params["conv3_w"].shape[0])
    assert Cout == C, "do_res=True requires out_channels == in_channels"
    HW = H * W
    f32 = jnp.float32

    # ---- batch folding: g samples per grid step so g*C fills 8 sublanes ----
    g = min(N, max(1, 8 // C))
    while N % g:
        g -= 1
    gC = g * C
    NB = N // g                                      # grid steps

    # ---- host glue: zero-copy reshape + tiny parameter packing ----
    x_r = x.astype(f32).reshape(NB, gC, HW)          # sample-major rows r = s*C + c

    # per-tap spatial validity masks (replace explicit zero padding), (K*K, HW)
    sidx = jnp.arange(HW, dtype=jnp.int32)
    hh, ww = sidx // W, sidx % W
    masks = []
    for kh in range(K):
        for kw in range(K):
            dh, dw = kh - pad, kw - pad
            masks.append((hh + dh >= 0) & (hh + dh < H)
                         & (ww + dw >= 0) & (ww + dw < W))
    tapmask = jnp.stack(masks).astype(f32)           # (K*K, HW)

    # fused per-tap operand: wm[t, r, p] = mask[t, p] * w_dw[r % C, t]
    w_dw = params["conv1_w"].reshape(C, K * K).astype(f32)            # (C, K*K)
    w_dw_t = jnp.tile(w_dw, (g, 1))                                   # (gC, K*K)
    wm = tapmask[:, None, :] * jnp.transpose(w_dw_t)[:, :, None]      # (K*K, gC, HW)

    # pack all tiny per-channel vectors into one operand (one DMA)
    R = max(gC, Cexp)

    def _col(v):
        v = jnp.asarray(v, f32).reshape(-1)
        return jnp.pad(v, (0, R - v.shape[0]))

    pvec = jnp.stack([
        _col(jnp.tile(params["conv1_b"].reshape(-1).astype(f32), g)),  # 0: dw bias
        _col(jnp.tile(params["norm_w"].reshape(-1).astype(f32), g)),   # 1: GN weight
        _col(jnp.tile(params["norm_b"].reshape(-1).astype(f32), g)),   # 2: GN bias
        _col(params["conv2_b"]),                                       # 3: expand bias
        _col(params["grn_gamma"]),                                     # 4: GRN gamma
        _col(params["grn_beta"]),                                      # 5: GRN beta
        _col(params["conv3_b"]),                                       # 6: proj bias
    ], axis=1)                                                         # (R, 7)

    w2 = params["conv2_w"].reshape(Cexp, C).astype(f32)                # (Cexp, C)
    w3 = params["conv3_w"].reshape(Cout, Cexp).astype(f32)             # (Cout, Cexp)

    def kernel(x_ref, wm_ref, pv_ref, w2_ref, w3_ref, o_ref):
        xin = x_ref[0]                                                 # (gC, HW)

        # --- depthwise KxK conv: 49 lane rolls + fused mask*weight FMAs ---
        acc = jnp.zeros((gC, HW), f32)
        for kh in range(K):
            for kw in range(K):
                tap = kh * K + kw
                off = (kh - pad) * W + (kw - pad)                      # flat shift
                shifted = xin if off == 0 else pltpu.roll(xin, (-off) % HW, 1)
                acc = acc + shifted * wm_ref[tap]                      # 1 mul + 1 add
        acc = acc + pv_ref[0:gC, 0:1]

        # --- GroupNorm(num_groups=C): per-(sample,channel) lane reductions ---
        mu = jnp.mean(acc, axis=1, keepdims=True)                      # (gC, 1)
        var = jnp.mean((acc - mu) * (acc - mu), axis=1, keepdims=True)
        xn = (acc - mu) * jax.lax.rsqrt(var + 1e-5)
        xn = xn * pv_ref[0:gC, 1:2] + pv_ref[0:gC, 2:3]

        w2m = w2_ref[...]                                              # (Cexp, C)
        w3m = w3_ref[...]                                              # (Cout, Cexp)
        b2c = pv_ref[0:Cexp, 3:4]
        gamc = pv_ref[0:Cexp, 4:5]
        betc = pv_ref[0:Cexp, 5:6]
        b3c = pv_ref[0:Cout, 6:7]

        # conv2 / GELU / GRN / conv3 are per-sample (GRN's channel mean is
        # per-sample); Cexp rows already fill a vreg, so no utilization loss.
        for s in range(g):
            xns = xn[s * C:(s + 1) * C, :]                             # (C, HW)

            # --- conv2 (1x1 expansion) as C broadcast VPU FMAs ---
            y = jnp.zeros((Cexp, HW), f32)
            for c in range(C):
                y = y + w2m[:, c:c + 1] * xns[c:c + 1, :]
            y = y + b2c

            # --- exact GELU: 0.5*y*(1+erf(y/sqrt(2))), erf via A&S 7.1.26 ---
            z = y * 0.7071067811865476
            sgn = jnp.where(z >= 0.0, 1.0, -1.0)
            az = jnp.abs(z)
            tt = 1.0 / (1.0 + 0.3275911 * az)              # exact divide (accuracy)
            poly = ((((1.061405429 * tt - 1.453152027) * tt + 1.421413741) * tt
                     - 0.284496736) * tt + 0.254829592) * tt
            erf = sgn * (1.0 - poly * jnp.exp(-az * az))
            y = 0.5 * y * (1.0 + erf)

            # --- GRN: spatial L2 (lane reduce) then per-sample channel mean ---
            gx = jnp.sqrt(jnp.sum(y * y, axis=1, keepdims=True))       # (Cexp, 1)
            nx = gx / (jnp.mean(gx, axis=0, keepdims=True) + 1e-6)
            y = gamc * (y * nx) + betc + y

            # --- conv3 (1x1 projection) + residual, lane-dense store ---
            zo = jnp.zeros((Cout, HW), f32)
            for e in range(Cexp):
                zo = zo + w3m[:, e:e + 1] * y[e:e + 1, :]
            o_ref[0, pl.ds(s * C, C), :] = zo + b3c + xin[s * C:(s + 1) * C, :]

    out = pl.pallas_call(
        kernel,
        out_shape=jax.ShapeDtypeStruct((NB, gC, HW), f32),
        grid_spec=pltpu.PrefetchScalarGridSpec(
            num_scalar_prefetch=0,
            grid=(NB,),
            in_specs=[
                pl.BlockSpec((1, gC, HW), lambda b: (b, 0, 0)),
                pl.BlockSpec(wm.shape, lambda b: (0, 0, 0)),
                pl.BlockSpec(pvec.shape, lambda b: (0, 0)),
                pl.BlockSpec(w2.shape, lambda b: (0, 0)),
                pl.BlockSpec(w3.shape, lambda b: (0, 0)),
            ],
            out_specs=pl.BlockSpec((1, gC, HW), lambda b: (b, 0, 0)),
        ),
        compiler_params=pltpu.CompilerParams(
            dimension_semantics=("parallel",)),
    )(x_r, wm, pvec, w2, w3)

    return out.reshape(N, C, H, W)                                     # NCHW


def mednext_reference(x, params, kernel_size=7):
    """Pure-JAX reference mirroring the PyTorch forward (NCHW)."""
    K = kernel_size
    pad = K // 2
    N, C, H, W = x.shape
    Cexp = params["conv2_w"].shape[0]
    hi = jax.lax.Precision.HIGHEST
    x1 = jax.lax.conv_general_dilated(
        x, params["conv1_w"], window_strides=(1, 1),
        padding=[(pad, pad), (pad, pad)],
        dimension_numbers=("NCHW", "OIHW", "NCHW"),
        feature_group_count=C, precision=hi)
    x1 = x1 + params["conv1_b"].reshape(1, C, 1, 1)
    mu = x1.mean(axis=(2, 3), keepdims=True)
    var = ((x1 - mu) ** 2).mean(axis=(2, 3), keepdims=True)
    x1 = (x1 - mu) / jnp.sqrt(var + 1e-5)
    x1 = x1 * params["norm_w"].reshape(1, C, 1, 1) + params["norm_b"].reshape(1, C, 1, 1)
    x1 = jnp.einsum("ec,nchw->nehw", params["conv2_w"].reshape(Cexp, C), x1, precision=hi)
    x1 = x1 + params["conv2_b"].reshape(1, Cexp, 1, 1)
    x1 = 0.5 * x1 * (1.0 + jax.lax.erf(x1 / jnp.sqrt(2.0)))
    gx = jnp.sqrt(jnp.sum(x1 ** 2, axis=(2, 3), keepdims=True))
    nx = gx / (gx.mean(axis=1, keepdims=True) + 1e-6)
    x1 = (params["grn_gamma"].reshape(1, Cexp, 1, 1) * (x1 * nx)
          + params["grn_beta"].reshape(1, Cexp, 1, 1) + x1)
    x1 = jnp.einsum("oe,nehw->nohw", params["conv3_w"].reshape(-1, Cexp), x1, precision=hi)
    x1 = x1 + params["conv3_b"].reshape(1, -1, 1, 1)
    return x + x1


if __name__ == "__main__":
    N, C, H, W = 2, 4, 16, 16
    exp_r, K = 2, 7
    Cexp, Cout = exp_r * C, C
    f32 = jnp.float32

    key = jax.random.PRNGKey(0)
    ks = jax.random.split(key, 11)
    params = {
        "conv1_w":  0.10 * jax.random.normal(ks[0], (C, 1, K, K), f32),       # depthwise
        "conv1_b":  0.10 * jax.random.normal(ks[1], (C,), f32),
        "norm_w":   1.00 + 0.10 * jax.random.normal(ks[2], (C,), f32),
        "norm_b":   0.10 * jax.random.normal(ks[3], (C,), f32),
        "conv2_w":  0.30 * jax.random.normal(ks[4], (Cexp, C, 1, 1), f32),
        "conv2_b":  0.10 * jax.random.normal(ks[5], (Cexp,), f32),
        "grn_gamma": 0.20 * jax.random.normal(ks[6], (1, Cexp, 1, 1), f32),
        "grn_beta":  0.20 * jax.random.normal(ks[7], (1, Cexp, 1, 1), f32),
        "conv3_w":  0.30 * jax.random.normal(ks[8], (Cout, Cexp, 1, 1), f32),
        "conv3_b":  0.10 * jax.random.normal(ks[9], (Cout,), f32),
    }
    x = jax.random.normal(ks[10], (N, C, H, W), f32)

    out = jax.block_until_ready(mednext_block(x, params, kernel_size=K))
    ref = jax.block_until_ready(mednext_reference(x, params, kernel_size=K))

    assert out.shape == (N, Cout, H, W)
    max_err = float(jnp.max(jnp.abs(out - ref)))
    if not (max_err < 5e-3):
        raise AssertionError(f"Pallas kernel mismatch vs reference: max abs err {max_err}")
    print("KERNEL_OK")
</pallas_src>

<mosaic_0001>
module attributes {stable_mosaic.version = 11 : i64} {
  func.func @kernel(%arg0: i32, %arg1: memref<1x8x256xf32, #tpu.memory_space<vmem>>, %arg2: memref<49x8x256xf32, #tpu.memory_space<vmem>>, %arg3: memref<8x7xf32, #tpu.memory_space<vmem>>, %arg4: memref<8x4xf32, #tpu.memory_space<vmem>>, %arg5: memref<4x8xf32, #tpu.memory_space<vmem>>, %arg6: memref<1x8x256xf32, #tpu.memory_space<vmem>>) attributes {dimension_semantics = [#tpu.dimension_semantics<parallel>], iteration_bounds = array<i64: 1>, scalar_prefetch = 0 : i64, scratch_operands = 0 : i64, tpu.core_type = #tpu.core_type<tc>, window_params = [{transform_indices = @transform_0, window_bounds = array<i64: 1, 8, 256>}, {pipeline_mode = #tpu.pipeline_mode<synchronous>, transform_indices = @transform_1, window_bounds = array<i64: 49, 8, 256>}, {pipeline_mode = #tpu.pipeline_mode<synchronous>, transform_indices = @transform_2, window_bounds = array<i64: 8, 7>}, {pipeline_mode = #tpu.pipeline_mode<synchronous>, transform_indices = @transform_3, window_bounds = array<i64: 8, 4>}, {pipeline_mode = #tpu.pipeline_mode<synchronous>, transform_indices = @transform_4, window_bounds = array<i64: 4, 8>}, {transform_indices = @transform_5, window_bounds = array<i64: 1, 8, 256>}]} {
    %c0 = arith.constant 0 : index
    %c0_0 = arith.constant 0 : index
    %c0_1 = arith.constant 0 : index
    %0 = vector.load %arg1[%c0, %c0_0, %c0_1] : memref<1x8x256xf32, #tpu.memory_space<vmem>>, vector<1x8x256xf32>
    %1 = vector.shape_cast %0 : vector<1x8x256xf32> to vector<8x256xf32>
    %cst = arith.constant 0.000000e+00 : f32
    %2 = vector.broadcast %cst : f32 to vector<8x256xf32>
    %c51_i32 = arith.constant 51 : i32
    %3 = tpu.dynamic_rotate %1 by %c51_i32 dim 1 : vector<8x256xf32>, i32 -> vector<8x256xf32>
    %c0_2 = arith.constant 0 : index
    %c0_3 = arith.constant 0 : index
    %c0_4 = arith.constant 0 : index
    %4 = vector.load %arg2[%c0_2, %c0_3, %c0_4] : memref<49x8x256xf32, #tpu.memory_space<vmem>>, vector<1x8x256xf32>
    %5 = vector.shape_cast %4 : vector<1x8x256xf32> to vector<8x256xf32>
    %6 = arith.mulf %3, %5 : vector<8x256xf32>
    %7 = arith.addf %2, %6 : vector<8x256xf32>
    %c50_i32 = arith.constant 50 : i32
    %8 = tpu.dynamic_rotate %1 by %c50_i32 dim 1 : vector<8x256xf32>, i32 -> vector<8x256xf32>
    %c1 = arith.constant 1 : index
    %c0_5 = arith.constant 0 : index
    %c0_6 = arith.constant 0 : index
    %9 = vector.load %arg2[%c1, %c0_5, %c0_6] : memref<49x8x256xf32, #tpu.memory_space<vmem>>, vector<1x8x256xf32>
    %10 = vector.shape_cast %9 : vector<1x8x256xf32> to vector<8x256xf32>
    %11 = arith.mulf %8, %10 : vector<8x256xf32>
    %12 = arith.addf %7, %11 : vector<8x256xf32>
    %c49_i32 = arith.constant 49 : i32
    %13 = tpu.dynamic_rotate %1 by %c49_i32 dim 1 : vector<8x256xf32>, i32 -> vector<8x256xf32>
    %c2 = arith.constant 2 : index
    %c0_7 = arith.constant 0 : index
    %c0_8 = arith.constant 0 : index
    %14 = vector.load %arg2[%c2, %c0_7, %c0_8] : memref<49x8x256xf32, #tpu.memory_space<vmem>>, vector<1x8x256xf32>
    %15 = vector.shape_cast %14 : vector<1x8x256xf32> to vector<8x256xf32>
    %16 = arith.mulf %13, %15 : vector<8x256xf32>
    %17 = arith.addf %12, %16 : vector<8x256xf32>
    %c48_i32 = arith.constant 48 : i32
    %18 = tpu.dynamic_rotate %1 by %c48_i32 dim 1 : vector<8x256xf32>, i32 -> vector<8x256xf32>
    %c3 = arith.constant 3 : index
    %c0_9 = arith.constant 0 : index
    %c0_10 = arith.constant 0 : index
    %19 = vector.load %arg2[%c3, %c0_9, %c0_10] : memref<49x8x256xf32, #tpu.memory_space<vmem>>, vector<1x8x256xf32>
    %20 = vector.shape_cast %19 : vector<1x8x256xf32> to vector<8x256xf32>
    %21 = arith.mulf %18, %20 : vector<8x256xf32>
    %22 = arith.addf %17, %21 : vector<8x256xf32>
    %c47_i32 = arith.constant 47 : i32
    %23 = tpu.dynamic_rotate %1 by %c47_i32 dim 1 : vector<8x256xf32>, i32 -> vector<8x256xf32>
    %c4 = arith.constant 4 : index
    %c0_11 = arith.constant 0 : index
    %c0_12 = arith.constant 0 : index
    %24 = vector.load %arg2[%c4, %c0_11, %c0_12] : memref<49x8x256xf32, #tpu.memory_space<vmem>>, vector<1x8x256xf32>
    %25 = vector.shape_cast %24 : vector<1x8x256xf32> to vector<8x256xf32>
    %26 = arith.mulf %23, %25 : vector<8x256xf32>
    %27 = arith.addf %22, %26 : vector<8x256xf32>
    %c46_i32 = arith.constant 46 : i32
    %28 = tpu.dynamic_rotate %1 by %c46_i32 dim 1 : vector<8x256xf32>, i32 -> vector<8x256xf32>
    %c5 = arith.constant 5 : index
    %c0_13 = arith.constant 0 : index
    %c0_14 = arith.constant 0 : index
    %29 = vector.load %arg2[%c5, %c0_13, %c0_14] : memref<49x8x256xf32, #tpu.memory_space<vmem>>, vector<1x8x256xf32>
    %30 = vector.shape_cast %29 : vector<1x8x256xf32> to vector<8x256xf32>
    %31 = arith.mulf %28, %30 : vector<8x256xf32>
    %32 = arith.addf %27, %31 : vector<8x256xf32>
    %c45_i32 = arith.constant 45 : i32
    %33 = tpu.dynamic_rotate %1 by %c45_i32 dim 1 : vector<8x256xf32>, i32 -> vector<8x256xf32>
    %c6 = arith.constant 6 : index
    %c0_15 = arith.constant 0 : index
    %c0_16 = arith.constant 0 : index
    %34 = vector.load %arg2[%c6, %c0_15, %c0_16] : memref<49x8x256xf32, #tpu.memory_space<vmem>>, vector<1x8x256xf32>
    %35 = vector.shape_cast %34 : vector<1x8x256xf32> to vector<8x256xf32>
    %36 = arith.mulf %33, %35 : vector<8x256xf32>
    %37 = arith.addf %32, %36 : vector<8x256xf32>
    %c35_i32 = arith.constant 35 : i32
    %38 = tpu.dynamic_rotate %1 by %c35_i32 dim 1 : vector<8x256xf32>, i32 -> vector<8x256xf32>
    %c7 = arith.constant 7 : index
    %c0_17 = arith.constant 0 : index
    %c0_18 = arith.constant 0 : index
    %39 = vector.load %arg2[%c7, %c0_17, %c0_18] : memref<49x8x256xf32, #tpu.memory_space<vmem>>, vector<1x8x256xf32>
    %40 = vector.shape_cast %39 : vector<1x8x256xf32> to vector<8x256xf32>
    %41 = arith.mulf %38, %40 : vector<8x256xf32>
    %42 = arith.addf %37, %41 : vector<8x256xf32>
    %c34_i32 = arith.constant 34 : i32
    %43 = tpu.dynamic_rotate %1 by %c34_i32 dim 1 : vector<8x256xf32>, i32 -> vector<8x256xf32>
    %c8 = arith.constant 8 : index
    %c0_19 = arith.constant 0 : index
    %c0_20 = arith.constant 0 : index
    %44 = vector.load %arg2[%c8, %c0_19, %c0_20] : memref<49x8x256xf32, #tpu.memory_space<vmem>>, vector<1x8x256xf32>
    %45 = vector.shape_cast %44 : vector<1x8x256xf32> to vector<8x256xf32>
    %46 = arith.mulf %43, %45 : vector<8x256xf32>
    %47 = arith.addf %42, %46 : vector<8x256xf32>
    %c33_i32 = arith.constant 33 : i32
    %48 = tpu.dynamic_rotate %1 by %c33_i32 dim 1 : vector<8x256xf32>, i32 -> vector<8x256xf32>
    %c9 = arith.constant 9 : index
    %c0_21 = arith.constant 0 : index
    %c0_22 = arith.constant 0 : index
    %49 = vector.load %arg2[%c9, %c0_21, %c0_22] : memref<49x8x256xf32, #tpu.memory_space<vmem>>, vector<1x8x256xf32>
    %50 = vector.shape_cast %49 : vector<1x8x256xf32> to vector<8x256xf32>
    %51 = arith.mulf %48, %50 : vector<8x256xf32>
    %52 = arith.addf %47, %51 : vector<8x256xf32>
    %c32_i32 = arith.constant 32 : i32
    %53 = tpu.dynamic_rotate %1 by %c32_i32 dim 1 : vector<8x256xf32>, i32 -> vector<8x256xf32>
    %c10 = arith.constant 10 : index
    %c0_23 = arith.constant 0 : index
    %c0_24 = arith.constant 0 : index
    %54 = vector.load %arg2[%c10, %c0_23, %c0_24] : memref<49x8x256xf32, #tpu.memory_space<vmem>>, vector<1x8x256xf32>
    %55 = vector.shape_cast %54 : vector<1x8x256xf32> to vector<8x256xf32>
    %56 = arith.mulf %53, %55 : vector<8x256xf32>
    %57 = arith.addf %52, %56 : vector<8x256xf32>
    %c31_i32 = arith.constant 31 : i32
    %58 = tpu.dynamic_rotate %1 by %c31_i32 dim 1 : vector<8x256xf32>, i32 -> vector<8x256xf32>
    %c11 = arith.constant 11 : index
    %c0_25 = arith.constant 0 : index
    %c0_26 = arith.constant 0 : index
    %59 = vector.load %arg2[%c11, %c0_25, %c0_26] : memref<49x8x256xf32, #tpu.memory_space<vmem>>, vector<1x8x256xf32>
    %60 = vector.shape_cast %59 : vector<1x8x256xf32> to vector<8x256xf32>
    %61 = arith.mulf %58, %60 : vector<8x256xf32>
    %62 = arith.addf %57, %61 : vector<8x256xf32>
    %c30_i32 = arith.constant 30 : i32
    %63 = tpu.dynamic_rotate %1 by %c30_i32 dim 1 : vector<8x256xf32>, i32 -> vector<8x256xf32>
    %c12 = arith.constant 12 : index
    %c0_27 = arith.constant 0 : index
    %c0_28 = arith.constant 0 : index
    %64 = vector.load %arg2[%c12, %c0_27, %c0_28] : memref<49x8x256xf32, #tpu.memory_space<vmem>>, vector<1x8x256xf32>
    %65 = vector.shape_cast %64 : vector<1x8x256xf32> to vector<8x256xf32>
    %66 = arith.mulf %63, %65 : vector<8x256xf32>
    %67 = arith.addf %62, %66 : vector<8x256xf32>
    %c29_i32 = arith.constant 29 : i32
    %68 = tpu.dynamic_rotate %1 by %c29_i32 dim 1 : vector<8x256xf32>, i32 -> vector<8x256xf32>
    %c13 = arith.constant 13 : index
    %c0_29 = arith.constant 0 : index
    %c0_30 = arith.constant 0 : index
    %69 = vector.load %arg2[%c13, %c0_29, %c0_30] : memref<49x8x256xf32, #tpu.memory_space<vmem>>, vector<1x8x256xf32>
    %70 = vector.shape_cast %69 : vector<1x8x256xf32> to vector<8x256xf32>
    %71 = arith.mulf %68, %70 : vector<8x256xf32>
    %72 = arith.addf %67, %71 : vector<8x256xf32>
    %c19_i32 = arith.constant 19 : i32
    %73 = tpu.dynamic_rotate %1 by %c19_i32 dim 1 : vector<8x256xf32>, i32 -> vector<8x256xf32>
    %c14 = arith.constant 14 : index
    %c0_31 = arith.constant 0 : index
    %c0_32 = arith.constant 0 : index
    %74 = vector.load %arg2[%c14, %c0_31, %c0_32] : memref<49x8x256xf32, #tpu.memory_space<vmem>>, vector<1x8x256xf32>
    %75 = vector.shape_cast %74 : vector<1x8x256xf32> to vector<8x256xf32>
    %76 = arith.mulf %73, %75 : vector<8x256xf32>
    %77 = arith.addf %72, %76 : vector<8x256xf32>
    %c18_i32 = arith.constant 18 : i32
    %78 = tpu.dynamic_rotate %1 by %c18_i32 dim 1 : vector<8x256xf32>, i32 -> vector<8x256xf32>
    %c15 = arith.constant 15 : index
    %c0_33 = arith.constant 0 : index
    %c0_34 = arith.constant 0 : index
    %79 = vector.load %arg2[%c15, %c0_33, %c0_34] : memref<49x8x256xf32, #tpu.memory_space<vmem>>, vector<1x8x256xf32>
    %80 = vector.shape_cast %79 : vector<1x8x256xf32> to vector<8x256xf32>
    %81 = arith.mulf %78, %80 : vector<8x256xf32>
    %82 = arith.addf %77, %81 : vector<8x256xf32>
    %c17_i32 = arith.constant 17 : i32
    %83 = tpu.dynamic_rotate %1 by %c17_i32 dim 1 : vector<8x256xf32>, i32 -> vector<8x256xf32>
    %c16 = arith.constant 16 : index
    %c0_35 = arith.constant 0 : index
    %c0_36 = arith.constant 0 : index
    %84 = vector.load %arg2[%c16, %c0_35, %c0_36] : memref<49x8x256xf32, #tpu.memory_space<vmem>>, vector<1x8x256xf32>
    %85 = vector.shape_cast %84 : vector<1x8x256xf32> to vector<8x256xf32>
    %86 = arith.mulf %83, %85 : vector<8x256xf32>
    %87 = arith.addf %82, %86 : vector<8x256xf32>
    %c16_i32 = arith.constant 16 : i32
    %88 = tpu.dynamic_rotate %1 by %c16_i32 dim 1 : vector<8x256xf32>, i32 -> vector<8x256xf32>
    %c17 = arith.constant 17 : index
    %c0_37 = arith.constant 0 : index
    %c0_38 = arith.constant 0 : index
    %89 = vector.load %arg2[%c17, %c0_37, %c0_38] : memref<49x8x256xf32, #tpu.memory_space<vmem>>, vector<1x8x256xf32>
    %90 = vector.shape_cast %89 : vector<1x8x256xf32> to vector<8x256xf32>
    %91 = arith.mulf %88, %90 : vector<8x256xf32>
    %92 = arith.addf %87, %91 : vector<8x256xf32>
    %c15_i32 = arith.constant 15 : i32
    %93 = tpu.dynamic_rotate %1 by %c15_i32 dim 1 : vector<8x256xf32>, i32 -> vector<8x256xf32>
    %c18 = arith.constant 18 : index
    %c0_39 = arith.constant 0 : index
    %c0_40 = arith.constant 0 : index
    %94 = vector.load %arg2[%c18, %c0_39, %c0_40] : memref<49x8x256xf32, #tpu.memory_space<vmem>>, vector<1x8x256xf32>
    %95 = vector.shape_cast %94 : vector<1x8x256xf32> to vector<8x256xf32>
    %96 = arith.mulf %93, %95 : vector<8x256xf32>
    %97 = arith.addf %92, %96 : vector<8x256xf32>
    %c14_i32 = arith.constant 14 : i32
    %98 = tpu.dynamic_rotate %1 by %c14_i32 dim 1 : vector<8x256xf32>, i32 -> vector<8x256xf32>
    %c19 = arith.constant 19 : index
    %c0_41 = arith.constant 0 : index
    %c0_42 = arith.constant 0 : index
    %99 = vector.load %arg2[%c19, %c0_41, %c0_42] : memref<49x8x256xf32, #tpu.memory_space<vmem>>, vector<1x8x256xf32>
    %100 = vector.shape_cast %99 : vector<1x8x256xf32> to vector<8x256xf32>
    %101 = arith.mulf %98, %100 : vector<8x256xf32>
    %102 = arith.addf %97, %101 : vector<8x256xf32>
    %c13_i32 = arith.constant 13 : i32
    %103 = tpu.dynamic_rotate %1 by %c13_i32 dim 1 : vector<8x256xf32>, i32 -> vector<8x256xf32>
    %c20 = arith.constant 20 : index
    %c0_43 = arith.constant 0 : index
    %c0_44 = arith.constant 0 : index
    %104 = vector.load %arg2[%c20, %c0_43, %c0_44] : memref<49x8x256xf32, #tpu.memory_space<vmem>>, vector<1x8x256xf32>
    %105 = vector.shape_cast %104 : vector<1x8x256xf32> to vector<8x256xf32>
    %106 = arith.mulf %103, %105 : vector<8x256xf32>
    %107 = arith.addf %102, %106 : vector<8x256xf32>
    %c3_i32 = arith.constant 3 : i32
    %108 = tpu.dynamic_rotate %1 by %c3_i32 dim 1 : vector<8x256xf32>, i32 -> vector<8x256xf32>
    %c21 = arith.constant 21 : index
    %c0_45 = arith.constant 0 : index
    %c0_46 = arith.constant 0 : index
    %109 = vector.load %arg2[%c21, %c0_45, %c0_46] : memref<49x8x256xf32, #tpu.memory_space<vmem>>, vector<1x8x256xf32>
    %110 = vector.shape_cast %109 : vector<1x8x256xf32> to vector<8x256xf32>
    %111 = arith.mulf %108, %110 : vector<8x256xf32>
    %112 = arith.addf %107, %111 : vector<8x256xf32>
    %c2_i32 = arith.constant 2 : i32
    %113 = tpu.dynamic_rotate %1 by %c2_i32 dim 1 : vector<8x256xf32>, i32 -> vector<8x256xf32>
    %c22 = arith.constant 22 : index
    %c0_47 = arith.constant 0 : index
    %c0_48 = arith.constant 0 : index
    %114 = vector.load %arg2[%c22, %c0_47, %c0_48] : memref<49x8x256xf32, #tpu.memory_space<vmem>>, vector<1x8x256xf32>
    %115 = vector.shape_cast %114 : vector<1x8x256xf32> to vector<8x256xf32>
    %116 = arith.mulf %113, %115 : vector<8x256xf32>
    %117 = arith.addf %112, %116 : vector<8x256xf32>
    %c1_i32 = arith.constant 1 : i32
    %118 = tpu.dynamic_rotate %1 by %c1_i32 dim 1 : vector<8x256xf32>, i32 -> vector<8x256xf32>
    %c23 = arith.constant 23 : index
    %c0_49 = arith.constant 0 : index
    %c0_50 = arith.constant 0 : index
    %119 = vector.load %arg2[%c23, %c0_49, %c0_50] : memref<49x8x256xf32, #tpu.memory_space<vmem>>, vector<1x8x256xf32>
    %120 = vector.shape_cast %119 : vector<1x8x256xf32> to vector<8x256xf32>
    %121 = arith.mulf %118, %120 : vector<8x256xf32>
    %122 = arith.addf %117, %121 : vector<8x256xf32>
    %c24 = arith.constant 24 : index
    %c0_51 = arith.constant 0 : index
    %c0_52 = arith.constant 0 : index
    %123 = vector.load %arg2[%c24, %c0_51, %c0_52] : memref<49x8x256xf32, #tpu.memory_space<vmem>>, vector<1x8x256xf32>
    %124 = vector.shape_cast %123 : vector<1x8x256xf32> to vector<8x256xf32>
    %125 = arith.mulf %1, %124 : vector<8x256xf32>
    %126 = arith.addf %122, %125 : vector<8x256xf32>
    %c255_i32 = arith.constant 255 : i32
    %127 = tpu.dynamic_rotate %1 by %c255_i32 dim 1 : vector<8x256xf32>, i32 -> vector<8x256xf32>
    %c25 = arith.constant 25 : index
    %c0_53 = arith.constant 0 : index
    %c0_54 = arith.constant 0 : index
    %128 = vector.load %arg2[%c25, %c0_53, %c0_54] : memref<49x8x256xf32, #tpu.memory_space<vmem>>, vector<1x8x256xf32>
    %129 = vector.shape_cast %128 : vector<1x8x256xf32> to vector<8x256xf32>
    %130 = arith.mulf %127, %129 : vector<8x256xf32>
    %131 = arith.addf %126, %130 : vector<8x256xf32>
    %c254_i32 = arith.constant 254 : i32
    %132 = tpu.dynamic_rotate %1 by %c254_i32 dim 1 : vector<8x256xf32>, i32 -> vector<8x256xf32>
    %c26 = arith.constant 26 : index
    %c0_55 = arith.constant 0 : index
    %c0_56 = arith.constant 0 : index
    %133 = vector.load %arg2[%c26, %c0_55, %c0_56] : memref<49x8x256xf32, #tpu.memory_space<vmem>>, vector<1x8x256xf32>
    %134 = vector.shape_cast %133 : vector<1x8x256xf32> to vector<8x256xf32>
    %135 = arith.mulf %132, %134 : vector<8x256xf32>
    %136 = arith.addf %131, %135 : vector<8x256xf32>
    %c253_i32 = arith.constant 253 : i32
    %137 = tpu.dynamic_rotate %1 by %c253_i32 dim 1 : vector<8x256xf32>, i32 -> vector<8x256xf32>
    %c27 = arith.constant 27 : index
    %c0_57 = arith.constant 0 : index
    %c0_58 = arith.constant 0 : index
    %138 = vector.load %arg2[%c27, %c0_57, %c0_58] : memref<49x8x256xf32, #tpu.memory_space<vmem>>, vector<1x8x256xf32>
    %139 = vector.shape_cast %138 : vector<1x8x256xf32> to vector<8x256xf32>
    %140 = arith.mulf %137, %139 : vector<8x256xf32>
    %141 = arith.addf %136, %140 : vector<8x256xf32>
    %c243_i32 = arith.constant 243 : i32
    %142 = tpu.dynamic_rotate %1 by %c243_i32 dim 1 : vector<8x256xf32>, i32 -> vector<8x256xf32>
    %c28 = arith.constant 28 : index
    %c0_59 = arith.constant 0 : index
    %c0_60 = arith.constant 0 : index
    %143 = vector.load %arg2[%c28, %c0_59, %c0_60] : memref<49x8x256xf32, #tpu.memory_space<vmem>>, vector<1x8x256xf32>
    %144 = vector.shape_cast %143 : vector<1x8x256xf32> to vector<8x256xf32>
    %145 = arith.mulf %142, %144 : vector<8x256xf32>
    %146 = arith.addf %141, %145 : vector<8x256xf32>
    %c242_i32 = arith.constant 242 : i32
    %147 = tpu.dynamic_rotate %1 by %c242_i32 dim 1 : vector<8x256xf32>, i32 -> vector<8x256xf32>
    %c29 = arith.constant 29 : index
    %c0_61 = arith.constant 0 : index
    %c0_62 = arith.constant 0 : index
    %148 = vector.load %arg2[%c29, %c0_61, %c0_62] : memref<49x8x256xf32, #tpu.memory_space<vmem>>, vector<1x8x256xf32>
    %149 = vector.shape_cast %148 : vector<1x8x256xf32> to vector<8x256xf32>
    %150 = arith.mulf %147, %149 : vector<8x256xf32>
    %151 = arith.addf %146, %150 : vector<8x256xf32>
    %c241_i32 = arith.constant 241 : i32
    %152 = tpu.dynamic_rotate %1 by %c241_i32 dim 1 : vector<8x256xf32>, i32 -> vector<8x256xf32>
    %c30 = arith.constant 30 : index
    %c0_63 = arith.constant 0 : index
    %c0_64 = arith.constant 0 : index
    %153 = vector.load %arg2[%c30, %c0_63, %c0_64] : memref<49x8x256xf32, #tpu.memory_space<vmem>>, vector<1x8x256xf32>
    %154 = vector.shape_cast %153 : vector<1x8x256xf32> to vector<8x256xf32>
    %155 = arith.mulf %152, %154 : vector<8x256xf32>
    %156 = arith.addf %151, %155 : vector<8x256xf32>
    %c240_i32 = arith.constant 240 : i32
    %157 = tpu.dynamic_rotate %1 by %c240_i32 dim 1 : vector<8x256xf32>, i32 -> vector<8x256xf32>
    %c31 = arith.constant 31 : index
    %c0_65 = arith.constant 0 : index
    %c0_66 = arith.constant 0 : index
    %158 = vector.load %arg2[%c31, %c0_65, %c0_66] : memref<49x8x256xf32, #tpu.memory_space<vmem>>, vector<1x8x256xf32>
    %159 = vector.shape_cast %158 : vector<1x8x256xf32> to vector<8x256xf32>
    %160 = arith.mulf %157, %159 : vector<8x256xf32>
    %161 = arith.addf %156, %160 : vector<8x256xf32>
    %c239_i32 = arith.constant 239 : i32
    %162 = tpu.dynamic_rotate %1 by %c239_i32 dim 1 : vector<8x256xf32>, i32 -> vector<8x256xf32>
    %c32 = arith.constant 32 : index
    %c0_67 = arith.constant 0 : index
    %c0_68 = arith.constant 0 : index
    %163 = vector.load %arg2[%c32, %c0_67, %c0_68] : memref<49x8x256xf32, #tpu.memory_space<vmem>>, vector<1x8x256xf32>
    %164 = vector.shape_cast %163 : vector<1x8x256xf32> to vector<8x256xf32>
    %165 = arith.mulf %162, %164 : vector<8x256xf32>
    %166 = arith.addf %161, %165 : vector<8x256xf32>
    %c238_i32 = arith.constant 238 : i32
    %167 = tpu.dynamic_rotate %1 by %c238_i32 dim 1 : vector<8x256xf32>, i32 -> vector<8x256xf32>
    %c33 = arith.constant 33 : index
    %c0_69 = arith.constant 0 : index
    %c0_70 = arith.constant 0 : index
    %168 = vector.load %arg2[%c33, %c0_69, %c0_70] : memref<49x8x256xf32, #tpu.memory_space<vmem>>, vector<1x8x256xf32>
    %169 = vector.shape_cast %168 : vector<1x8x256xf32> to vector<8x256xf32>
    %170 = arith.mulf %167, %169 : vector<8x256xf32>
    %171 = arith.addf %166, %170 : vector<8x256xf32>
    %c237_i32 = arith.constant 237 : i32
    %172 = tpu.dynamic_rotate %1 by %c237_i32 dim 1 : vector<8x256xf32>, i32 -> vector<8x256xf32>
    %c34 = arith.constant 34 : index
    %c0_71 = arith.constant 0 : index
    %c0_72 = arith.constant 0 : index
    %173 = vector.load %arg2[%c34, %c0_71, %c0_72] : memref<49x8x256xf32, #tpu.memory_space<vmem>>, vector<1x8x256xf32>
    %174 = vector.shape_cast %173 : vector<1x8x256xf32> to vector<8x256xf32>
    %175 = arith.mulf %172, %174 : vector<8x256xf32>
    %176 = arith.addf %171, %175 : vector<8x256xf32>
    %c227_i32 = arith.constant 227 : i32
    %177 = tpu.dynamic_rotate %1 by %c227_i32 dim 1 : vector<8x256xf32>, i32 -> vector<8x256xf32>
    %c35 = arith.constant 35 : index
    %c0_73 = arith.constant 0 : index
    %c0_74 = arith.constant 0 : index
    %178 = vector.load %arg2[%c35, %c0_73, %c0_74] : memref<49x8x256xf32, #tpu.memory_space<vmem>>, vector<1x8x256xf32>
    %179 = vector.shape_cast %178 : vector<1x8x256xf32> to vector<8x256xf32>
    %180 = arith.mulf %177, %179 : vector<8x256xf32>
    %181 = arith.addf %176, %180 : vector<8x256xf32>
    %c226_i32 = arith.constant 226 : i32
    %182 = tpu.dynamic_rotate %1 by %c226_i32 dim 1 : vector<8x256xf32>, i32 -> vector<8x256xf32>
    %c36 = arith.constant 36 : index
    %c0_75 = arith.constant 0 : index
    %c0_76 = arith.constant 0 : index
    %183 = vector.load %arg2[%c36, %c0_75, %c0_76] : memref<49x8x256xf32, #tpu.memory_space<vmem>>, vector<1x8x256xf32>
    %184 = vector.shape_cast %183 : vector<1x8x256xf32> to vector<8x256xf32>
    %185 = arith.mulf %182, %184 : vector<8x256xf32>
    %186 = arith.addf %181, %185 : vector<8x256xf32>
    %c225_i32 = arith.constant 225 : i32
    %187 = tpu.dynamic_rotate %1 by %c225_i32 dim 1 : vector<8x256xf32>, i32 -> vector<8x256xf32>
    %c37 = arith.constant 37 : index
    %c0_77 = arith.constant 0 : index
    %c0_78 = arith.constant 0 : index
    %188 = vector.load %arg2[%c37, %c0_77, %c0_78] : memref<49x8x256xf32, #tpu.memory_space<vmem>>, vector<1x8x256xf32>
    %189 = vector.shape_cast %188 : vector<1x8x256xf32> to vector<8x256xf32>
    %190 = arith.mulf %187, %189 : vector<8x256xf32>
    %191 = arith.addf %186, %190 : vector<8x256xf32>
    %c224_i32 = arith.constant 224 : i32
    %192 = tpu.dynamic_rotate %1 by %c224_i32 dim 1 : vector<8x256xf32>, i32 -> vector<8x256xf32>
    %c38 = arith.constant 38 : index
    %c0_79 = arith.constant 0 : index
    %c0_80 = arith.constant 0 : index
    %193 = vector.load %arg2[%c38, %c0_79, %c0_80] : memref<49x8x256xf32, #tpu.memory_space<vmem>>, vector<1x8x256xf32>
    %194 = vector.shape_cast %193 : vector<1x8x256xf32> to vector<8x256xf32>
    %195 = arith.mulf %192, %194 : vector<8x256xf32>
    %196 = arith.addf %191, %195 : vector<8x256xf32>
    %c223_i32 = arith.constant 223 : i32
    %197 = tpu.dynamic_rotate %1 by %c223_i32 dim 1 : vector<8x256xf32>, i32 -> vector<8x256xf32>
    %c39 = arith.constant 39 : index
    %c0_81 = arith.constant 0 : index
    %c0_82 = arith.constant 0 : index
    %198 = vector.load %arg2[%c39, %c0_81, %c0_82] : memref<49x8x256xf32, #tpu.memory_space<vmem>>, vector<1x8x256xf32>
    %199 = vector.shape_cast %198 : vector<1x8x256xf32> to vector<8x256xf32>
    %200 = arith.mulf %197, %199 : vector<8x256xf32>
    %201 = arith.addf %196, %200 : vector<8x256xf32>
    %c222_i32 = arith.constant 222 : i32
    %202 = tpu.dynamic_rotate %1 by %c222_i32 dim 1 : vector<8x256xf32>, i32 -> vector<8x256xf32>
    %c40 = arith.constant 40 : index
    %c0_83 = arith.constant 0 : index
    %c0_84 = arith.constant 0 : index
    %203 = vector.load %arg2[%c40, %c0_83, %c0_84] : memref<49x8x256xf32, #tpu.memory_space<vmem>>, vector<1x8x256xf32>
    %204 = vector.shape_cast %203 : vector<1x8x256xf32> to vector<8x256xf32>
    %205 = arith.mulf %202, %204 : vector<8x256xf32>
    %206 = arith.addf %201, %205 : vector<8x256xf32>
    %c221_i32 = arith.constant 221 : i32
    %207 = tpu.dynamic_rotate %1 by %c221_i32 dim 1 : vector<8x256xf32>, i32 -> vector<8x256xf32>
    %c41 = arith.constant 41 : index
    %c0_85 = arith.constant 0 : index
    %c0_86 = arith.constant 0 : index
    %208 = vector.load %arg2[%c41, %c0_85, %c0_86] : memref<49x8x256xf32, #tpu.memory_space<vmem>>, vector<1x8x256xf32>
    %209 = vector.shape_cast %208 : vector<1x8x256xf32> to vector<8x256xf32>
    %210 = arith.mulf %207, %209 : vector<8x256xf32>
    %211 = arith.addf %206, %210 : vector<8x256xf32>
    %c211_i32 = arith.constant 211 : i32
    %212 = tpu.dynamic_rotate %1 by %c211_i32 dim 1 : vector<8x256xf32>, i32 -> vector<8x256xf32>
    %c42 = arith.constant 42 : index
    %c0_87 = arith.constant 0 : index
    %c0_88 = arith.constant 0 : index
    %213 = vector.load %arg2[%c42, %c0_87, %c0_88] : memref<49x8x256xf32, #tpu.memory_space<vmem>>, vector<1x8x256xf32>
    %214 = vector.shape_cast %213 : vector<1x8x256xf32> to vector<8x256xf32>
    %215 = arith.mulf %212, %214 : vector<8x256xf32>
    %216 = arith.addf %211, %215 : vector<8x256xf32>
    %c210_i32 = arith.constant 210 : i32
    %217 = tpu.dynamic_rotate %1 by %c210_i32 dim 1 : vector<8x256xf32>, i32 -> vector<8x256xf32>
    %c43 = arith.constant 43 : index
    %c0_89 = arith.constant 0 : index
    %c0_90 = arith.constant 0 : index
    %218 = vector.load %arg2[%c43, %c0_89, %c0_90] : memref<49x8x256xf32, #tpu.memory_space<vmem>>, vector<1x8x256xf32>
    %219 = vector.shape_cast %218 : vector<1x8x256xf32> to vector<8x256xf32>
    %220 = arith.mulf %217, %219 : vector<8x256xf32>
    %221 = arith.addf %216, %220 : vector<8x256xf32>
    %c209_i32 = arith.constant 209 : i32
    %222 = tpu.dynamic_rotate %1 by %c209_i32 dim 1 : vector<8x256xf32>, i32 -> vector<8x256xf32>
    %c44 = arith.constant 44 : index
    %c0_91 = arith.constant 0 : index
    %c0_92 = arith.constant 0 : index
    %223 = vector.load %arg2[%c44, %c0_91, %c0_92] : memref<49x8x256xf32, #tpu.memory_space<vmem>>, vector<1x8x256xf32>
    %224 = vector.shape_cast %223 : vector<1x8x256xf32> to vector<8x256xf32>
    %225 = arith.mulf %222, %224 : vector<8x256xf32>
    %226 = arith.addf %221, %225 : vector<8x256xf32>
    %c208_i32 = arith.constant 208 : i32
    %227 = tpu.dynamic_rotate %1 by %c208_i32 dim 1 : vector<8x256xf32>, i32 -> vector<8x256xf32>
    %c45 = arith.constant 45 : index
    %c0_93 = arith.constant 0 : index
    %c0_94 = arith.constant 0 : index
    %228 = vector.load %arg2[%c45, %c0_93, %c0_94] : memref<49x8x256xf32, #tpu.memory_space<vmem>>, vector<1x8x256xf32>
    %229 = vector.shape_cast %228 : vector<1x8x256xf32> to vector<8x256xf32>
    %230 = arith.mulf %227, %229 : vector<8x256xf32>
    %231 = arith.addf %226, %230 : vector<8x256xf32>
    %c207_i32 = arith.constant 207 : i32
    %232 = tpu.dynamic_rotate %1 by %c207_i32 dim 1 : vector<8x256xf32>, i32 -> vector<8x256xf32>
    %c46 = arith.constant 46 : index
    %c0_95 = arith.constant 0 : index
    %c0_96 = arith.constant 0 : index
    %233 = vector.load %arg2[%c46, %c0_95, %c0_96] : memref<49x8x256xf32, #tpu.memory_space<vmem>>, vector<1x8x256xf32>
    %234 = vector.shape_cast %233 : vector<1x8x256xf32> to vector<8x256xf32>
    %235 = arith.mulf %232, %234 : vector<8x256xf32>
    %236 = arith.addf %231, %235 : vector<8x256xf32>
    %c206_i32 = arith.constant 206 : i32
    %237 = tpu.dynamic_rotate %1 by %c206_i32 dim 1 : vector<8x256xf32>, i32 -> vector<8x256xf32>
    %c47 = arith.constant 47 : index
    %c0_97 = arith.constant 0 : index
    %c0_98 = arith.constant 0 : index
    %238 = vector.load %arg2[%c47, %c0_97, %c0_98] : memref<49x8x256xf32, #tpu.memory_space<vmem>>, vector<1x8x256xf32>
    %239 = vector.shape_cast %238 : vector<1x8x256xf32> to vector<8x256xf32>
    %240 = arith.mulf %237, %239 : vector<8x256xf32>
    %241 = arith.addf %236, %240 : vector<8x256xf32>
    %c205_i32 = arith.constant 205 : i32
    %242 = tpu.dynamic_rotate %1 by %c205_i32 dim 1 : vector<8x256xf32>, i32 -> vector<8x256xf32>
    %c48 = arith.constant 48 : index
    %c0_99 = arith.constant 0 : index
    %c0_100 = arith.constant 0 : index
    %243 = vector.load %arg2[%c48, %c0_99, %c0_100] : memref<49x8x256xf32, #tpu.memory_space<vmem>>, vector<1x8x256xf32>
    %244 = vector.shape_cast %243 : vector<1x8x256xf32> to vector<8x256xf32>
    %245 = arith.mulf %242, %244 : vector<8x256xf32>
    %246 = arith.addf %241, %245 : vector<8x256xf32>
    %c0_101 = arith.constant 0 : index
    %c0_102 = arith.constant 0 : index
    %247 = vector.load %arg3[%c0_101, %c0_102] : memref<8x7xf32, #tpu.memory_space<vmem>>, vector<8x1xf32>
    %248 = vector.broadcast %247 : vector<8x1xf32> to vector<8x256xf32>
    %249 = arith.addf %246, %248 : vector<8x256xf32>
    %cst_103 = arith.constant dense<0.000000e+00> : vector<8xf32>
    %250 = vector.multi_reduction <add>, %249, %cst_103 [1] : vector<8x256xf32> to vector<8xf32>
    %251 = vector.shape_cast %250 : vector<8xf32> to vector<8x1xf32>
    %cst_104 = arith.constant 2.560000e+02 : f32
    %252 = vector.broadcast %cst_104 : f32 to vector<8x1xf32>
    %253 = arith.divf %251, %252 : vector<8x1xf32>
    %254 = vector.broadcast %253 : vector<8x1xf32> to vector<8x256xf32>
    %255 = arith.subf %249, %254 : vector<8x256xf32>
    %256 = vector.broadcast %253 : vector<8x1xf32> to vector<8x256xf32>
    %257 = arith.subf %249, %256 : vector<8x256xf32>
    %258 = arith.mulf %255, %257 : vector<8x256xf32>
    %cst_105 = arith.constant dense<0.000000e+00> : vector<8xf32>
    %259 = vector.multi_reduction <add>, %258, %cst_105 [1] : vector<8x256xf32> to vector<8xf32>
    %260 = vector.shape_cast %259 : vector<8xf32> to vector<8x1xf32>
    %cst_106 = arith.constant 2.560000e+02 : f32
    %261 = vector.broadcast %cst_106 : f32 to vector<8x1xf32>
    %262 = arith.divf %260, %261 : vector<8x1xf32>
    %263 = vector.broadcast %253 : vector<8x1xf32> to vector<8x256xf32>
    %264 = arith.subf %249, %263 : vector<8x256xf32>
    %cst_107 = arith.constant 9.99999974E-6 : f32
    %265 = vector.broadcast %cst_107 : f32 to vector<8x1xf32>
    %266 = arith.addf %262, %265 : vector<8x1xf32>
    %267 = math.rsqrt %266 : vector<8x1xf32>
    %268 = vector.broadcast %267 : vector<8x1xf32> to vector<8x256xf32>
    %269 = arith.mulf %264, %268 : vector<8x256xf32>
    %c0_108 = arith.constant 0 : index
    %c1_109 = arith.constant 1 : index
    %270 = vector.load %arg3[%c0_108, %c1_109] : memref<8x7xf32, #tpu.memory_space<vmem>>, vector<8x1xf32>
    %271 = vector.broadcast %270 : vector<8x1xf32> to vector<8x256xf32>
    %272 = arith.mulf %269, %271 : vector<8x256xf32>
    %c0_110 = arith.constant 0 : index
    %c2_111 = arith.constant 2 : index
    %273 = vector.load %arg3[%c0_110, %c2_111] : memref<8x7xf32, #tpu.memory_space<vmem>>, vector<8x1xf32>
    %274 = vector.broadcast %273 : vector<8x1xf32> to vector<8x256xf32>
    %275 = arith.addf %272, %274 : vector<8x256xf32>
    %c0_112 = arith.constant 0 : index
    %c0_113 = arith.constant 0 : index
    %276 = vector.load %arg4[%c0_112, %c0_113] : memref<8x4xf32, #tpu.memory_space<vmem>>, vector<8x4xf32>
    %c0_114 = arith.constant 0 : index
    %c0_115 = arith.constant 0 : index
    %277 = vector.load %arg5[%c0_114, %c0_115] : memref<4x8xf32, #tpu.memory_space<vmem>>, vector<4x8xf32>
    %c0_116 = arith.constant 0 : index
    %c3_117 = arith.constant 3 : index
    %278 = vector.load %arg3[%c0_116, %c3_117] : memref<8x7xf32, #tpu.memory_space<vmem>>, vector<8x1xf32>
    %c0_118 = arith.constant 0 : index
    %c4_119 = arith.constant 4 : index
    %279 = vector.load %arg3[%c0_118, %c4_119] : memref<8x7xf32, #tpu.memory_space<vmem>>, vector<8x1xf32>
    %c0_120 = arith.constant 0 : index
    %c5_121 = arith.constant 5 : index
    %280 = vector.load %arg3[%c0_120, %c5_121] : memref<8x7xf32, #tpu.memory_space<vmem>>, vector<8x1xf32>
    %c0_122 = arith.constant 0 : index
    %c6_123 = arith.constant 6 : index
    %281 = vector.load %arg3[%c0_122, %c6_123] : memref<8x7xf32, #tpu.memory_space<vmem>>, vector<4x1xf32>
    %282 = vector.extract_strided_slice %275 {offsets = [0, 0], sizes = [4, 256], strides = [1, 1]} : vector<8x256xf32> to vector<4x256xf32>
    %cst_124 = arith.constant 0.000000e+00 : f32
    %283 = vector.broadcast %cst_124 : f32 to vector<8x256xf32>
    %284 = vector.extract_strided_slice %276 {offsets = [0, 0], sizes = [8, 1], strides = [1, 1]} : vector<8x4xf32> to vector<8x1xf32>
    %285 = vector.extract_strided_slice %282 {offsets = [0, 0], sizes = [1, 256], strides = [1, 1]} : vector<4x256xf32> to vector<1x256xf32>
    %286 = vector.broadcast %284 : vector<8x1xf32> to vector<8x256xf32>
    %287 = vector.broadcast %285 : vector<1x256xf32> to vector<8x256xf32>
    %288 = arith.mulf %286, %287 : vector<8x256xf32>
    %289 = arith.addf %283, %288 : vector<8x256xf32>
    %290 = vector.extract_strided_slice %276 {offsets = [0, 1], sizes = [8, 1], strides = [1, 1]} : vector<8x4xf32> to vector<8x1xf32>
    %291 = vector.extract_strided_slice %282 {offsets = [1, 0], sizes = [1, 256], strides = [1, 1]} : vector<4x256xf32> to vector<1x256xf32>
    %292 = vector.broadcast %290 : vector<8x1xf32> to vector<8x256xf32>
    %293 = vector.broadcast %291 : vector<1x256xf32> to vector<8x256xf32>
    %294 = arith.mulf %292, %293 : vector<8x256xf32>
    %295 = arith.addf %289, %294 : vector<8x256xf32>
    %296 = vector.extract_strided_slice %276 {offsets = [0, 2], sizes = [8, 1], strides = [1, 1]} : vector<8x4xf32> to vector<8x1xf32>
    %297 = vector.extract_strided_slice %282 {offsets = [2, 0], sizes = [1, 256], strides = [1, 1]} : vector<4x256xf32> to vector<1x256xf32>
    %298 = vector.broadcast %296 : vector<8x1xf32> to vector<8x256xf32>
    %299 = vector.broadcast %297 : vector<1x256xf32> to vector<8x256xf32>
    %300 = arith.mulf %298, %299 : vector<8x256xf32>
    %301 = arith.addf %295, %300 : vector<8x256xf32>
    %302 = vector.extract_strided_slice %276 {offsets = [0, 3], sizes = [8, 1], strides = [1, 1]} : vector<8x4xf32> to vector<8x1xf32>
    %303 = vector.extract_strided_slice %282 {offsets = [3, 0], sizes = [1, 256], strides = [1, 1]} : vector<4x256xf32> to vector<1x256xf32>
    %304 = vector.broadcast %302 : vector<8x1xf32> to vector<8x256xf32>
    %305 = vector.broadcast %303 : vector<1x256xf32> to vector<8x256xf32>
    %306 = arith.mulf %304, %305 : vector<8x256xf32>
    %307 = arith.addf %301, %306 : vector<8x256xf32>
    %308 = vector.broadcast %278 : vector<8x1xf32> to vector<8x256xf32>
    %309 = arith.addf %307, %308 : vector<8x256xf32>
    %cst_125 = arith.constant 0.707106769 : f32
    %310 = vector.broadcast %cst_125 : f32 to vector<8x256xf32>
    %311 = arith.mulf %309, %310 : vector<8x256xf32>
    %cst_126 = arith.constant 0.000000e+00 : f32
    %312 = vector.broadcast %cst_126 : f32 to vector<8x256xf32>
    %313 = arith.cmpf oge, %311, %312 : vector<8x256xf32>
    %cst_127 = arith.constant 1.000000e+00 : f32
    %cst_128 = arith.constant -1.000000e+00 : f32
    %314 = vector.broadcast %cst_127 : f32 to vector<8x256xf32>
    %315 = vector.broadcast %cst_128 : f32 to vector<8x256xf32>
    %316 = arith.select %313, %314, %315 : vector<8x256xi1>, vector<8x256xf32>
    %317 = math.absf %311 : vector<8x256xf32>
    %cst_129 = arith.constant 0.327591091 : f32
    %318 = vector.broadcast %cst_129 : f32 to vector<8x256xf32>
    %319 = arith.mulf %318, %317 : vector<8x256xf32>
    %cst_130 = arith.constant 1.000000e+00 : f32
    %320 = vector.broadcast %cst_130 : f32 to vector<8x256xf32>
    %321 = arith.addf %320, %319 : vector<8x256xf32>
    %cst_131 = arith.constant 1.000000e+00 : f32
    %322 = vector.broadcast %cst_131 : f32 to vector<8x256xf32>
    %323 = arith.divf %322, %321 : vector<8x256xf32>
    %cst_132 = arith.constant 1.06140542 : f32
    %324 = vector.broadcast %cst_132 : f32 to vector<8x256xf32>
    %325 = arith.mulf %324, %323 : vector<8x256xf32>
    %cst_133 = arith.constant 1.45315206 : f32
    %326 = vector.broadcast %cst_133 : f32 to vector<8x256xf32>
    %327 = arith.subf %325, %326 : vector<8x256xf32>
    %328 = arith.mulf %327, %323 : vector<8x256xf32>
    %cst_134 = arith.constant 1.42141378 : f32
    %329 = vector.broadcast %cst_134 : f32 to vector<8x256xf32>
    %330 = arith.addf %328, %329 : vector<8x256xf32>
    %331 = arith.mulf %330, %323 : vector<8x256xf32>
    %cst_135 = arith.constant 0.284496725 : f32
    %332 = vector.broadcast %cst_135 : f32 to vector<8x256xf32>
    %333 = arith.subf %331, %332 : vector<8x256xf32>
    %334 = arith.mulf %333, %323 : vector<8x256xf32>
    %cst_136 = arith.constant 0.254829586 : f32
    %335 = vector.broadcast %cst_136 : f32 to vector<8x256xf32>
    %336 = arith.addf %334, %335 : vector<8x256xf32>
    %337 = arith.mulf %336, %323 : vector<8x256xf32>
    %cst_137 = arith.constant 0.000000e+00 : f32
    %338 = vector.broadcast %cst_137 : f32 to vector<8x256xf32>
    %339 = arith.subf %338, %317 : vector<8x256xf32>
    %340 = arith.mulf %339, %317 : vector<8x256xf32>
    %341 = math.exp %340 : vector<8x256xf32>
    %342 = arith.mulf %337, %341 : vector<8x256xf32>
    %cst_138 = arith.constant 1.000000e+00 : f32
    %343 = vector.broadcast %cst_138 : f32 to vector<8x256xf32>
    %344 = arith.subf %343, %342 : vector<8x256xf32>
    %345 = arith.mulf %316, %344 : vector<8x256xf32>
    %cst_139 = arith.constant 5.000000e-01 : f32
    %346 = vector.broadcast %cst_139 : f32 to vector<8x256xf32>
    %347 = arith.mulf %346, %309 : vector<8x256xf32>
    %cst_140 = arith.constant 1.000000e+00 : f32
    %348 = vector.broadcast %cst_140 : f32 to vector<8x256xf32>
    %349 = arith.addf %348, %345 : vector<8x256xf32>
    %350 = arith.mulf %347, %349 : vector<8x256xf32>
    %351 = arith.mulf %350, %350 : vector<8x256xf32>
    %cst_141 = arith.constant dense<0.000000e+00> : vector<8xf32>
    %352 = vector.multi_reduction <add>, %351, %cst_141 [1] : vector<8x256xf32> to vector<8xf32>
    %353 = vector.shape_cast %352 : vector<8xf32> to vector<8x1xf32>
    %354 = math.sqrt %353 : vector<8x1xf32>
    %cst_142 = arith.constant dense<0.000000e+00> : vector<1xf32>
    %355 = vector.multi_reduction <add>, %354, %cst_142 [0] : vector<8x1xf32> to vector<1xf32>
    %356 = vector.shape_cast %355 : vector<1xf32> to vector<1x1xf32>
    %cst_143 = arith.constant 8.000000e+00 : f32
    %357 = vector.broadcast %cst_143 : f32 to vector<1x1xf32>
    %358 = arith.divf %356, %357 : vector<1x1xf32>
    %cst_144 = arith.constant 9.99999997E-7 : f32
    %359 = vector.broadcast %cst_144 : f32 to vector<1x1xf32>
    %360 = arith.addf %358, %359 : vector<1x1xf32>
    %361 = vector.broadcast %360 : vector<1x1xf32> to vector<8x1xf32>
    %362 = arith.divf %354, %361 : vector<8x1xf32>
    %363 = vector.broadcast %362 : vector<8x1xf32> to vector<8x256xf32>
    %364 = arith.mulf %350, %363 : vector<8x256xf32>
    %365 = vector.broadcast %279 : vector<8x1xf32> to vector<8x256xf32>
    %366 = arith.mulf %365, %364 : vector<8x256xf32>
    %367 = vector.broadcast %280 : vector<8x1xf32> to vector<8x256xf32>
    %368 = arith.addf %366, %367 : vector<8x256xf32>
    %369 = arith.addf %368, %350 : vector<8x256xf32>
    %cst_145 = arith.constant 0.000000e+00 : f32
    %370 = vector.broadcast %cst_145 : f32 to vector<4x256xf32>
    %371 = vector.extract_strided_slice %277 {offsets = [0, 0], sizes = [4, 1], strides = [1, 1]} : vector<4x8xf32> to vector<4x1xf32>
    %372 = vector.extract_strided_slice %369 {offsets = [0, 0], sizes = [1, 256], strides = [1, 1]} : vector<8x256xf32> to vector<1x256xf32>
    %373 = vector.broadcast %371 : vector<4x1xf32> to vector<4x256xf32>
    %374 = vector.broadcast %372 : vector<1x256xf32> to vector<4x256xf32>
    %375 = arith.mulf %373, %374 : vector<4x256xf32>
    %376 = arith.addf %370, %375 : vector<4x256xf32>
    %377 = vector.extract_strided_slice %277 {offsets = [0, 1], sizes = [4, 1], strides = [1, 1]} : vector<4x8xf32> to vector<4x1xf32>
    %378 = vector.extract_strided_slice %369 {offsets = [1, 0], sizes = [1, 256], strides = [1, 1]} : vector<8x256xf32> to vector<1x256xf32>
    %379 = vector.broadcast %377 : vector<4x1xf32> to vector<4x256xf32>
    %380 = vector.broadcast %378 : vector<1x256xf32> to vector<4x256xf32>
    %381 = arith.mulf %379, %380 : vector<4x256xf32>
    %382 = arith.addf %376, %381 : vector<4x256xf32>
    %383 = vector.extract_strided_slice %277 {offsets = [0, 2], sizes = [4, 1], strides = [1, 1]} : vector<4x8xf32> to vector<4x1xf32>
    %384 = vector.extract_strided_slice %369 {offsets = [2, 0], sizes = [1, 256], strides = [1, 1]} : vector<8x256xf32> to vector<1x256xf32>
    %385 = vector.broadcast %383 : vector<4x1xf32> to vector<4x256xf32>
    %386 = vector.broadcast %384 : vector<1x256xf32> to vector<4x256xf32>
    %387 = arith.mulf %385, %386 : vector<4x256xf32>
    %388 = arith.addf %382, %387 : vector<4x256xf32>
    %389 = vector.extract_strided_slice %277 {offsets = [0, 3], sizes = [4, 1], strides = [1, 1]} : vector<4x8xf32> to vector<4x1xf32>
    %390 = vector.extract_strided_slice %369 {offsets = [3, 0], sizes = [1, 256], strides = [1, 1]} : vector<8x256xf32> to vector<1x256xf32>
    %391 = vector.broadcast %389 : vector<4x1xf32> to vector<4x256xf32>
    %392 = vector.broadcast %390 : vector<1x256xf32> to vector<4x256xf32>
    %393 = arith.mulf %391, %392 : vector<4x256xf32>
    %394 = arith.addf %388, %393 : vector<4x256xf32>
    %395 = vector.extract_strided_slice %277 {offsets = [0, 4], sizes = [4, 1], strides = [1, 1]} : vector<4x8xf32> to vector<4x1xf32>
    %396 = vector.extract_strided_slice %369 {offsets = [4, 0], sizes = [1, 256], strides = [1, 1]} : vector<8x256xf32> to vector<1x256xf32>
    %397 = vector.broadcast %395 : vector<4x1xf32> to vector<4x256xf32>
    %398 = vector.broadcast %396 : vector<1x256xf32> to vector<4x256xf32>
    %399 = arith.mulf %397, %398 : vector<4x256xf32>
    %400 = arith.addf %394, %399 : vector<4x256xf32>
    %401 = vector.extract_strided_slice %277 {offsets = [0, 5], sizes = [4, 1], strides = [1, 1]} : vector<4x8xf32> to vector<4x1xf32>
    %402 = vector.extract_strided_slice %369 {offsets = [5, 0], sizes = [1, 256], strides = [1, 1]} : vector<8x256xf32> to vector<1x256xf32>
    %403 = vector.broadcast %401 : vector<4x1xf32> to vector<4x256xf32>
    %404 = vector.broadcast %402 : vector<1x256xf32> to vector<4x256xf32>
    %405 = arith.mulf %403, %404 : vector<4x256xf32>
    %406 = arith.addf %400, %405 : vector<4x256xf32>
    %407 = vector.extract_strided_slice %277 {offsets = [0, 6], sizes = [4, 1], strides = [1, 1]} : vector<4x8xf32> to vector<4x1xf32>
    %408 = vector.extract_strided_slice %369 {offsets = [6, 0], sizes = [1, 256], strides = [1, 1]} : vector<8x256xf32> to vector<1x256xf32>
    %409 = vector.broadcast %407 : vector<4x1xf32> to vector<4x256xf32>
    %410 = vector.broadcast %408 : vector<1x256xf32> to vector<4x256xf32>
    %411 = arith.mulf %409, %410 : vector<4x256xf32>
    %412 = arith.addf %406, %411 : vector<4x256xf32>
    %413 = vector.extract_strided_slice %277 {offsets = [0, 7], sizes = [4, 1], strides = [1, 1]} : vector<4x8xf32> to vector<4x1xf32>
    %414 = vector.extract_strided_slice %369 {offsets = [7, 0], sizes = [1, 256], strides = [1, 1]} : vector<8x256xf32> to vector<1x256xf32>
    %415 = vector.broadcast %413 : vector<4x1xf32> to vector<4x256xf32>
    %416 = vector.broadcast %414 : vector<1x256xf32> to vector<4x256xf32>
    %417 = arith.mulf %415, %416 : vector<4x256xf32>
    %418 = arith.addf %412, %417 : vector<4x256xf32>
    %419 = vector.broadcast %281 : vector<4x1xf32> to vector<4x256xf32>
    %420 = arith.addf %418, %419 : vector<4x256xf32>
    %421 = vector.extract_strided_slice %1 {offsets = [0, 0], sizes = [4, 256], strides = [1, 1]} : vector<8x256xf32> to vector<4x256xf32>
    %422 = arith.addf %420, %421 : vector<4x256xf32>
    %c0_146 = arith.constant 0 : index
    %c0_147 = arith.constant 0 : index
    %c0_148 = arith.constant 0 : index
    %423 = vector.load %arg6[%c0_146, %c0_147, %c0_148] : memref<1x8x256xf32, #tpu.memory_space<vmem>>, vector<1x4x256xf32>
    %424 = vector.shape_cast %423 : vector<1x4x256xf32> to vector<4x256xf32>
    %425 = vector.shape_cast %422 : vector<4x256xf32> to vector<1x4x256xf32>
    tpu.vector_store %arg6[%c0_146, %c0_147, %c0_148], %425 {strides = array<i32>} : memref<1x8x256xf32, #tpu.memory_space<vmem>>, vector<1x4x256xf32>,
    %426 = vector.extract_strided_slice %275 {offsets = [4, 0], sizes = [4, 256], strides = [1, 1]} : vector<8x256xf32> to vector<4x256xf32>
    %cst_149 = arith.constant 0.000000e+00 : f32
    %427 = vector.broadcast %cst_149 : f32 to vector<8x256xf32>
    %428 = vector.extract_strided_slice %276 {offsets = [0, 0], sizes = [8, 1], strides = [1, 1]} : vector<8x4xf32> to vector<8x1xf32>
    %429 = vector.extract_strided_slice %426 {offsets = [0, 0], sizes = [1, 256], strides = [1, 1]} : vector<4x256xf32> to vector<1x256xf32>
    %430 = vector.broadcast %428 : vector<8x1xf32> to vector<8x256xf32>
    %431 = vector.broadcast %429 : vector<1x256xf32> to vector<8x256xf32>
    %432 = arith.mulf %430, %431 : vector<8x256xf32>
    %433 = arith.addf %427, %432 : vector<8x256xf32>
    %434 = vector.extract_strided_slice %276 {offsets = [0, 1], sizes = [8, 1], strides = [1, 1]} : vector<8x4xf32> to vector<8x1xf32>
    %435 = vector.extract_strided_slice %426 {offsets = [1, 0], sizes = [1, 256], strides = [1, 1]} : vector<4x256xf32> to vector<1x256xf32>
    %436 = vector.broadcast %434 : vector<8x1xf32> to vector<8x256xf32>
    %437 = vector.broadcast %435 : vector<1x256xf32> to vector<8x256xf32>
    %438 = arith.mulf %436, %437 : vector<8x256xf32>
    %439 = arith.addf %433, %438 : vector<8x256xf32>
    %440 = vector.extract_strided_slice %276 {offsets = [0, 2], sizes = [8, 1], strides = [1, 1]} : vector<8x4xf32> to vector<8x1xf32>
    %441 = vector.extract_strided_slice %426 {offsets = [2, 0], sizes = [1, 256], strides = [1, 1]} : vector<4x256xf32> to vector<1x256xf32>
    %442 = vector.broadcast %440 : vector<8x1xf32> to vector<8x256xf32>
    %443 = vector.broadcast %441 : vector<1x256xf32> to vector<8x256xf32>
    %444 = arith.mulf %442, %443 : vector<8x256xf32>
    %445 = arith.addf %439, %444 : vector<8x256xf32>
    %446 = vector.extract_strided_slice %276 {offsets = [0, 3], sizes = [8, 1], strides = [1, 1]} : vector<8x4xf32> to vector<8x1xf32>
    %447 = vector.extract_strided_slice %426 {offsets = [3, 0], sizes = [1, 256], strides = [1, 1]} : vector<4x256xf32> to vector<1x256xf32>
    %448 = vector.broadcast %446 : vector<8x1xf32> to vector<8x256xf32>
    %449 = vector.broadcast %447 : vector<1x256xf32> to vector<8x256xf32>
    %450 = arith.mulf %448, %449 : vector<8x256xf32>
    %451 = arith.addf %445, %450 : vector<8x256xf32>
    %452 = vector.broadcast %278 : vector<8x1xf32> to vector<8x256xf32>
    %453 = arith.addf %451, %452 : vector<8x256xf32>
    %cst_150 = arith.constant 0.707106769 : f32
    %454 = vector.broadcast %cst_150 : f32 to vector<8x256xf32>
    %455 = arith.mulf %453, %454 : vector<8x256xf32>
    %cst_151 = arith.constant 0.000000e+00 : f32
    %456 = vector.broadcast %cst_151 : f32 to vector<8x256xf32>
    %457 = arith.cmpf oge, %455, %456 : vector<8x256xf32>
    %cst_152 = arith.constant 1.000000e+00 : f32
    %cst_153 = arith.constant -1.000000e+00 : f32
    %458 = vector.broadcast %cst_152 : f32 to vector<8x256xf32>
    %459 = vector.broadcast %cst_153 : f32 to vector<8x256xf32>
    %460 = arith.select %457, %458, %459 : vector<8x256xi1>, vector<8x256xf32>
    %461 = math.absf %455 : vector<8x256xf32>
    %cst_154 = arith.constant 0.327591091 : f32
    %462 = vector.broadcast %cst_154 : f32 to vector<8x256xf32>
    %463 = arith.mulf %462, %461 : vector<8x256xf32>
    %cst_155 = arith.constant 1.000000e+00 : f32
    %464 = vector.broadcast %cst_155 : f32 to vector<8x256xf32>
    %465 = arith.addf %464, %463 : vector<8x256xf32>
    %cst_156 = arith.constant 1.000000e+00 : f32
    %466 = vector.broadcast %cst_156 : f32 to vector<8x256xf32>
    %467 = arith.divf %466, %465 : vector<8x256xf32>
    %cst_157 = arith.constant 1.06140542 : f32
    %468 = vector.broadcast %cst_157 : f32 to vector<8x256xf32>
    %469 = arith.mulf %468, %467 : vector<8x256xf32>
    %cst_158 = arith.constant 1.45315206 : f32
    %470 = vector.broadcast %cst_158 : f32 to vector<8x256xf32>
    %471 = arith.subf %469, %470 : vector<8x256xf32>
    %472 = arith.mulf %471, %467 : vector<8x256xf32>
    %cst_159 = arith.constant 1.42141378 : f32
    %473 = vector.broadcast %cst_159 : f32 to vector<8x256xf32>
    %474 = arith.addf %472, %473 : vector<8x256xf32>
    %475 = arith.mulf %474, %467 : vector<8x256xf32>
    %cst_160 = arith.constant 0.284496725 : f32
    %476 = vector.broadcast %cst_160 : f32 to vector<8x256xf32>
    %477 = arith.subf %475, %476 : vector<8x256xf32>
    %478 = arith.mulf %477, %467 : vector<8x256xf32>
    %cst_161 = arith.constant 0.254829586 : f32
    %479 = vector.broadcast %cst_161 : f32 to vector<8x256xf32>
    %480 = arith.addf %478, %479 : vector<8x256xf32>
    %481 = arith.mulf %480, %467 : vector<8x256xf32>
    %cst_162 = arith.constant 0.000000e+00 : f32
    %482 = vector.broadcast %cst_162 : f32 to vector<8x256xf32>
    %483 = arith.subf %482, %461 : vector<8x256xf32>
    %484 = arith.mulf %483, %461 : vector<8x256xf32>
    %485 = math.exp %484 : vector<8x256xf32>
    %486 = arith.mulf %481, %485 : vector<8x256xf32>
    %cst_163 = arith.constant 1.000000e+00 : f32
    %487 = vector.broadcast %cst_163 : f32 to vector<8x256xf32>
    %488 = arith.subf %487, %486 : vector<8x256xf32>
    %489 = arith.mulf %460, %488 : vector<8x256xf32>
    %cst_164 = arith.constant 5.000000e-01 : f32
    %490 = vector.broadcast %cst_164 : f32 to vector<8x256xf32>
    %491 = arith.mulf %490, %453 : vector<8x256xf32>
    %cst_165 = arith.constant 1.000000e+00 : f32
    %492 = vector.broadcast %cst_165 : f32 to vector<8x256xf32>
    %493 = arith.addf %492, %489 : vector<8x256xf32>
    %494 = arith.mulf %491, %493 : vector<8x256xf32>
    %495 = arith.mulf %494, %494 : vector<8x256xf32>
    %cst_166 = arith.constant dense<0.000000e+00> : vector<8xf32>
    %496 = vector.multi_reduction <add>, %495, %cst_166 [1] : vector<8x256xf32> to vector<8xf32>
    %497 = vector.shape_cast %496 : vector<8xf32> to vector<8x1xf32>
    %498 = math.sqrt %497 : vector<8x1xf32>
    %cst_167 = arith.constant dense<0.000000e+00> : vector<1xf32>
    %499 = vector.multi_reduction <add>, %498, %cst_167 [0] : vector<8x1xf32> to vector<1xf32>
    %500 = vector.shape_cast %499 : vector<1xf32> to vector<1x1xf32>
    %cst_168 = arith.constant 8.000000e+00 : f32
    %501 = vector.broadcast %cst_168 : f32 to vector<1x1xf32>
    %502 = arith.divf %500, %501 : vector<1x1xf32>
    %cst_169 = arith.constant 9.99999997E-7 : f32
    %503 = vector.broadcast %cst_169 : f32 to vector<1x1xf32>
    %504 = arith.addf %502, %503 : vector<1x1xf32>
    %505 = vector.broadcast %504 : vector<1x1xf32> to vector<8x1xf32>
    %506 = arith.divf %498, %505 : vector<8x1xf32>
    %507 = vector.broadcast %506 : vector<8x1xf32> to vector<8x256xf32>
    %508 = arith.mulf %494, %507 : vector<8x256xf32>
    %509 = vector.broadcast %279 : vector<8x1xf32> to vector<8x256xf32>
    %510 = arith.mulf %509, %508 : vector<8x256xf32>
    %511 = vector.broadcast %280 : vector<8x1xf32> to vector<8x256xf32>
    %512 = arith.addf %510, %511 : vector<8x256xf32>
    %513 = arith.addf %512, %494 : vector<8x256xf32>
    %cst_170 = arith.constant 0.000000e+00 : f32
    %514 = vector.broadcast %cst_170 : f32 to vector<4x256xf32>
    %515 = vector.extract_strided_slice %277 {offsets = [0, 0], sizes = [4, 1], strides = [1, 1]} : vector<4x8xf32> to vector<4x1xf32>
    %516 = vector.extract_strided_slice %513 {offsets = [0, 0], sizes = [1, 256], strides = [1, 1]} : vector<8x256xf32> to vector<1x256xf32>
    %517 = vector.broadcast %515 : vector<4x1xf32> to vector<4x256xf32>
    %518 = vector.broadcast %516 : vector<1x256xf32> to vector<4x256xf32>
    %519 = arith.mulf %517, %518 : vector<4x256xf32>
    %520 = arith.addf %514, %519 : vector<4x256xf32>
    %521 = vector.extract_strided_slice %277 {offsets = [0, 1], sizes = [4, 1], strides = [1, 1]} : vector<4x8xf32> to vector<4x1xf32>
    %522 = vector.extract_strided_slice %513 {offsets = [1, 0], sizes = [1, 256], strides = [1, 1]} : vector<8x256xf32> to vector<1x256xf32>
    %523 = vector.broadcast %521 : vector<4x1xf32> to vector<4x256xf32>
    %524 = vector.broadcast %522 : vector<1x256xf32> to vector<4x256xf32>
    %525 = arith.mulf %523, %524 : vector<4x256xf32>
    %526 = arith.addf %520, %525 : vector<4x256xf32>
    %527 = vector.extract_strided_slice %277 {offsets = [0, 2], sizes = [4, 1], strides = [1, 1]} : vector<4x8xf32> to vector<4x1xf32>
    %528 = vector.extract_strided_slice %513 {offsets = [2, 0], sizes = [1, 256], strides = [1, 1]} : vector<8x256xf32> to vector<1x256xf32>
    %529 = vector.broadcast %527 : vector<4x1xf32> to vector<4x256xf32>
    %530 = vector.broadcast %528 : vector<1x256xf32> to vector<4x256xf32>
    %531 = arith.mulf %529, %530 : vector<4x256xf32>
    %532 = arith.addf %526, %531 : vector<4x256xf32>
    %533 = vector.extract_strided_slice %277 {offsets = [0, 3], sizes = [4, 1], strides = [1, 1]} : vector<4x8xf32> to vector<4x1xf32>
    %534 = vector.extract_strided_slice %513 {offsets = [3, 0], sizes = [1, 256], strides = [1, 1]} : vector<8x256xf32> to vector<1x256xf32>
    %535 = vector.broadcast %533 : vector<4x1xf32> to vector<4x256xf32>
    %536 = vector.broadcast %534 : vector<1x256xf32> to vector<4x256xf32>
    %537 = arith.mulf %535, %536 : vector<4x256xf32>
    %538 = arith.addf %532, %537 : vector<4x256xf32>
    %539 = vector.extract_strided_slice %277 {offsets = [0, 4], sizes = [4, 1], strides = [1, 1]} : vector<4x8xf32> to vector<4x1xf32>
    %540 = vector.extract_strided_slice %513 {offsets = [4, 0], sizes = [1, 256], strides = [1, 1]} : vector<8x256xf32> to vector<1x256xf32>
    %541 = vector.broadcast %539 : vector<4x1xf32> to vector<4x256xf32>
    %542 = vector.broadcast %540 : vector<1x256xf32> to vector<4x256xf32>
    %543 = arith.mulf %541, %542 : vector<4x256xf32>
    %544 = arith.addf %538, %543 : vector<4x256xf32>
    %545 = vector.extract_strided_slice %277 {offsets = [0, 5], sizes = [4, 1], strides = [1, 1]} : vector<4x8xf32> to vector<4x1xf32>
    %546 = vector.extract_strided_slice %513 {offsets = [5, 0], sizes = [1, 256], strides = [1, 1]} : vector<8x256xf32> to vector<1x256xf32>
    %547 = vector.broadcast %545 : vector<4x1xf32> to vector<4x256xf32>
    %548 = vector.broadcast %546 : vector<1x256xf32> to vector<4x256xf32>
    %549 = arith.mulf %547, %548 : vector<4x256xf32>
    %550 = arith.addf %544, %549 : vector<4x256xf32>
    %551 = vector.extract_strided_slice %277 {offsets = [0, 6], sizes = [4, 1], strides = [1, 1]} : vector<4x8xf32> to vector<4x1xf32>
    %552 = vector.extract_strided_slice %513 {offsets = [6, 0], sizes = [1, 256], strides = [1, 1]} : vector<8x256xf32> to vector<1x256xf32>
    %553 = vector.broadcast %551 : vector<4x1xf32> to vector<4x256xf32>
    %554 = vector.broadcast %552 : vector<1x256xf32> to vector<4x256xf32>
    %555 = arith.mulf %553, %554 : vector<4x256xf32>
    %556 = arith.addf %550, %555 : vector<4x256xf32>
    %557 = vector.extract_strided_slice %277 {offsets = [0, 7], sizes = [4, 1], strides = [1, 1]} : vector<4x8xf32> to vector<4x1xf32>
    %558 = vector.extract_strided_slice %513 {offsets = [7, 0], sizes = [1, 256], strides = [1, 1]} : vector<8x256xf32> to vector<1x256xf32>
    %559 = vector.broadcast %557 : vector<4x1xf32> to vector<4x256xf32>
    %560 = vector.broadcast %558 : vector<1x256xf32> to vector<4x256xf32>
    %561 = arith.mulf %559, %560 : vector<4x256xf32>
    %562 = arith.addf %556, %561 : vector<4x256xf32>
    %563 = vector.broadcast %281 : vector<4x1xf32> to vector<4x256xf32>
    %564 = arith.addf %562, %563 : vector<4x256xf32>
    %565 = vector.extract_strided_slice %1 {offsets = [4, 0], sizes = [4, 256], strides = [1, 1]} : vector<8x256xf32> to vector<4x256xf32>
    %566 = arith.addf %564, %565 : vector<4x256xf32>
    %c0_171 = arith.constant 0 : index
    %c4_172 = arith.constant 4 : index
    %c0_173 = arith.constant 0 : index
    %567 = vector.load %arg6[%c0_171, %c4_172, %c0_173] : memref<1x8x256xf32, #tpu.memory_space<vmem>>, vector<1x4x256xf32>
    %568 = vector.shape_cast %567 : vector<1x4x256xf32> to vector<4x256xf32>
    %569 = vector.shape_cast %566 : vector<4x256xf32> to vector<1x4x256xf32>
    tpu.vector_store %arg6[%c0_171, %c4_172, %c0_173], %569 {strides = array<i32>} : memref<1x8x256xf32, #tpu.memory_space<vmem>>, vector<1x4x256xf32>,
    return
  }
  func.func @transform_0(%arg0: i32) -> (i32, i32, i32) {
    %c0_i32 = arith.constant 0 : i32
    %c0_i32_0 = arith.constant 0 : i32
    %c0_i32_1 = arith.constant 0 : i32
    return %arg0, %c0_i32, %c0_i32_0 : i32, i32, i32
  }
  func.func @transform_1(%arg0: i32) -> (i32, i32, i32) {
    %c0_i32 = arith.constant 0 : i32
    %c0_i32_0 = arith.constant 0 : i32
    %c0_i32_1 = arith.constant 0 : i32
    %c0_i32_2 = arith.constant 0 : i32
    return %c0_i32, %c0_i32_0, %c0_i32_1 : i32, i32, i32
  }
  func.func @transform_2(%arg0: i32) -> (i32, i32) {
    %c0_i32 = arith.constant 0 : i32
    %c0_i32_0 = arith.constant 0 : i32
    %c0_i32_1 = arith.constant 0 : i32
    return %c0_i32, %c0_i32_0 : i32, i32
  }
  func.func @transform_3(%arg0: i32) -> (i32, i32) {
    %c0_i32 = arith.constant 0 : i32
    %c0_i32_0 = arith.constant 0 : i32
    %c0_i32_1 = arith.constant 0 : i32
    return %c0_i32, %c0_i32_0 : i32, i32
  }
  func.func @transform_4(%arg0: i32) -> (i32, i32) {
    %c0_i32 = arith.constant 0 : i32
    %c0_i32_0 = arith.constant 0 : i32
    %c0_i32_1 = arith.constant 0 : i32
    return %c0_i32, %c0_i32_0 : i32, i32
  }
  func.func @transform_5(%arg0: i32) -> (i32, i32, i32) {
    %c0_i32 = arith.constant 0 : i32
    %c0_i32_0 = arith.constant 0 : i32
    %c0_i32_1 = arith.constant 0 : i32
    return %arg0, %c0_i32, %c0_i32_0 : i32, i32, i32
  }
}

</mosaic_0001>

<llo_original>
// kernel: tpu_custom_call.1
$region0: #{tpu_custom_call.1}
  #allocation0 [shape = 'u32[]', space=smem, size = 0x4, offset = 0x4, fixed_abs, tag = 'smem constant byte address 0x4 - core index']
  #allocation1 [shape = 'u32[144,128]{1,0:T(1,128)}', space=vmem, size = 0x12000, scoped, tag = 'internal scratch']
  %s0 = inlined_call_operand.hbm [shape: f32[1,8,256], index: 0, kind: input, shape index: {}]
  %s1 = inlined_call_operand.hbm [shape: f32[49,8,256], index: 1, kind: input, shape index: {}]
  %s2 = inlined_call_operand.vmem [shape: f32[8,7], index: 2, kind: input, shape index: {}]
  %s3 = inlined_call_operand.vmem [shape: f32[8,4], index: 3, kind: input, shape index: {}]
  %s4 = inlined_call_operand.vmem [shape: f32[4,8], index: 4, kind: input, shape index: {}]
  %s5 = inlined_call_operand.hbm [shape: f32[1,8,256], index: 5, kind: output, shape index: {}]
  %s6 = sld [smem:[#allocation0]]
  $region38: #{tpu_custom_call.1} parent=0
    _
  %s8 = ssub.s32 1, %s6
  %s9 = scalar_select 0, %s8, %s6
  $region1: #{tpu_custom_call.1} parent=0
    #allocation2 [shape = 'u8[8192]{0}', space=vmem, size = 0x2000, scoped, tag = 'input window, operand 0, single buffered']
    #allocation3 [shape = 's32[1]{0}', space=sflag, size = 0x4, scoped, tag = 'scoped memory for tpu_custom_call.1']
    #allocation4 [shape = 's32[1]{0}', space=sflag, size = 0x4, scoped, tag = 'scoped memory for tpu_custom_call.1']
    #allocation5 [shape = 'u8[401408]{0}', space=vmem, size = 0x62000, scoped, tag = 'input window, operand 1, single buffered']
    #allocation6 [shape = 's32[1]{0}', space=sflag, size = 0x4, scoped, tag = 'scoped memory for tpu_custom_call.1']
    #allocation7 [shape = 'u8[8192]{0}', space=vmem, size = 0x2000, scoped, tag = 'output window, operand 0, single buffered']
    %10 = vsyncpa [#allocation3], 0
    %11 = vsyncpa [#allocation6], 0
    %12 = vsyncpa [#allocation4], 0
    // Predicated region
    $region2: #{tpu_custom_call.1} parent=1 // pred_check
      _
    $region3: #{tpu_custom_call.1} parent=1 // pred_check_branch
      %14 = sbr.rel (0) target = $region5
    $region4: #{tpu_custom_call.1} parent=1 // pred_region
      %s16 = ssub.s32 256, 256
      %17 = vsyncadd [#allocation3], %s16
      %s19 = sshll.u32 [#allocation2], 4
      %s20 = int_to_ptr.vmem [resolvable:$true] %s19
      %22 = dma.hbm_to_vmem [thread:$0]  %s0, 256, %s20, [#allocation3]
    $region5: #{tpu_custom_call.1} parent=1 // pred_fallthru
      _
    // Predicated region
    $region6: #{tpu_custom_call.1} parent=1 // pred_check
      _
    $region7: #{tpu_custom_call.1} parent=1 // pred_check_branch
      %24 = sbr.rel (0) target = $region9
    $region8: #{tpu_custom_call.1} parent=1 // pred_region
      %s26 = ssub.s32 12544, 12544
      %27 = vsyncadd [#allocation6], %s26
      %s28 = sshll.u32 [#allocation5], 4
      %s29 = int_to_ptr.vmem [resolvable:$true] %s28
      %34 = dma.hbm_to_vmem [thread:$0]  %s1, 12544, %s29, [#allocation6], 256, 256, 16
    $region9: #{tpu_custom_call.1} parent=1 // pred_fallthru
      _
    // Predicated region
    $region10: #{tpu_custom_call.1} parent=1 // pred_check
      _
    $region11: #{tpu_custom_call.1} parent=1 // pred_check_branch
      %36 = sbr.rel (0) target = $region13
    $region12: #{tpu_custom_call.1} parent=1 // pred_region
      _
    $region13: #{tpu_custom_call.1} parent=1 // pred_fallthru
      _
    // Predicated region
    $region14: #{tpu_custom_call.1} parent=1 // pred_check
      _
    $region15: #{tpu_custom_call.1} parent=1 // pred_check_branch
      %38 = sbr.rel (0) target = $region17
    $region16: #{tpu_custom_call.1} parent=1 // pred_region
      _
    $region17: #{tpu_custom_call.1} parent=1 // pred_fallthru
      _
    // Predicated region
    $region18: #{tpu_custom_call.1} parent=1 // pred_check
      _
    $region19: #{tpu_custom_call.1} parent=1 // pred_check_branch
      %40 = sbr.rel (0) target = $region21
    $region20: #{tpu_custom_call.1} parent=1 // pred_region
      _
    $region21: #{tpu_custom_call.1} parent=1 // pred_fallthru
      _
    // Predicated region
    $region22: #{tpu_custom_call.1} parent=1 // pred_check
      _
    $region23: #{tpu_custom_call.1} parent=1 // pred_check_branch
      %42 = sbr.rel (0) target = $region25
    $region24: #{tpu_custom_call.1} parent=1 // pred_region
      %43 = dma.done [#allocation3], 256
    $region25: #{tpu_custom_call.1} parent=1 // pred_fallthru
      _
    // Predicated region
    $region26: #{tpu_custom_call.1} parent=1 // pred_check
      _
    $region27: #{tpu_custom_call.1} parent=1 // pred_check_branch
      %45 = sbr.rel (0) target = $region29
    $region28: #{tpu_custom_call.1} parent=1 // pred_region
      %46 = dma.done [#allocation6], 12544
    $region29: #{tpu_custom_call.1} parent=1 // pred_fallthru
      _
    %v47 = vld [vmem:[#allocation2] sm:$0xff]
    %v48 = vld [vmem:[#allocation2 + $0x8] sm:$0xff]
    %49 = vrot.lane.b32.xlu0 %v47, 51
    %v50 = vpop.permute.xlu0 %49
    %51 = vrot.lane.b32.xlu0 %v48, 51
    %v52 = vpop.permute.xlu0 %51
    %v53 = vlaneseq
    %v54 = vand.u32 %v53, 127
    %vm55 = vcmp.lt.s32.totalorder %v54, 51
    %v56 = vsel %vm55, %v50, %v52
    %v57 = vsel %vm55, %v52, %v50
    %v58 = vld [vmem:[#allocation5] sm:$0xff]
    %v59 = vld [vmem:[#allocation5 + $0x8] sm:$0xff]
    %v60 = vmul.f32 %v57, %v58
    %v61 = vmul.f32 %v56, %v59
    %v62 = vadd.f32 %v60, 0.0
    %v63 = vadd.f32 %v61, 0.0
    %64 = vrot.lane.b32.xlu0 %v47, 50
    %v65 = vpop.permute.xlu0 %64
    %66 = vrot.lane.b32.xlu0 %v48, 50
    %v67 = vpop.permute.xlu0 %66
    %vm68 = vcmp.lt.s32.totalorder %v54, 50
    %v69 = vsel %vm68, %v65, %v67
    %v70 = vsel %vm68, %v67, %v65
    %s71 = scalar_lea.vmem [#allocation5], 16
    %v72 = vld [vmem:[%s71] sm:$0xff]
    %v73 = vld [vmem:[%s71 + $0x8] sm:$0xff]
    %v74 = vmul.f32 %v70, %v72
    %v75 = vmul.f32 %v69, %v73
    %v76 = vadd.f32 %v62, %v74
    %v77 = vadd.f32 %v63, %v75
    %78 = vrot.lane.b32.xlu0 %v47, 49
    %v79 = vpop.permute.xlu0 %78
    %80 = vrot.lane.b32.xlu0 %v48, 49
    %v81 = vpop.permute.xlu0 %80
    %vm82 = vcmp.lt.s32.totalorder %v54, 49
    %v83 = vsel %vm82, %v79, %v81
    %v84 = vsel %vm82, %v81, %v79
    %s85 = scalar_lea.vmem [#allocation5], 32
    %v86 = vld [vmem:[%s85] sm:$0xff]
    %v87 = vld [vmem:[%s85 + $0x8] sm:$0xff]
    %v88 = vmul.f32 %v84, %v86
    %v89 = vmul.f32 %v83, %v87
    %v90 = vadd.f32 %v76, %v88
    %v91 = vadd.f32 %v77, %v89
    %92 = vrot.lane.b32.xlu0 %v47, 48
    %v93 = vpop.permute.xlu0 %92
    %94 = vrot.lane.b32.xlu0 %v48, 48
    %v95 = vpop.permute.xlu0 %94
    %vm96 = vcmp.lt.s32.totalorder %v54, 48
    %v97 = vsel %vm96, %v93, %v95
    %v98 = vsel %vm96, %v95, %v93
    %s99 = scalar_lea.vmem [#allocation5], 48
    %v100 = vld [vmem:[%s99] sm:$0xff]
    %v101 = vld [vmem:[%s99 + $0x8] sm:$0xff]
    %v102 = vmul.f32 %v98, %v100
    %v103 = vmul.f32 %v97, %v101
    %v104 = vadd.f32 %v90, %v102
    %v105 = vadd.f32 %v91, %v103
    %106 = vrot.lane.b32.xlu0 %v47, 47
    %v107 = vpop.permute.xlu0 %106
    %108 = vrot.lane.b32.xlu0 %v48, 47
    %v109 = vpop.permute.xlu0 %108
    %vm110 = vcmp.lt.s32.totalorder %v54, 47
    %v111 = vsel %vm110, %v107, %v109
    %v112 = vsel %vm110, %v109, %v107
    %s113 = scalar_lea.vmem [#allocation5], 64
    %v114 = vld [vmem:[%s113] sm:$0xff]
    %v115 = vld [vmem:[%s113 + $0x8] sm:$0xff]
    %v116 = vmul.f32 %v112, %v114
    %v117 = vmul.f32 %v111, %v115
    %v118 = vadd.f32 %v104, %v116
    %v119 = vadd.f32 %v105, %v117
    %120 = vrot.lane.b32.xlu0 %v47, 46
    %v121 = vpop.permute.xlu0 %120
    %122 = vrot.lane.b32.xlu0 %v48, 46
    %v123 = vpop.permute.xlu0 %122
    %vm124 = vcmp.lt.s32.totalorder %v54, 46
    %v125 = vsel %vm124, %v121, %v123
    %v126 = vsel %vm124, %v123, %v121
    %s127 = scalar_lea.vmem [#allocation5], 80
    %v128 = vld [vmem:[%s127] sm:$0xff]
    %v129 = vld [vmem:[%s127 + $0x8] sm:$0xff]
    %v130 = vmul.f32 %v126, %v128
    %v131 = vmul.f32 %v125, %v129
    %v132 = vadd.f32 %v118, %v130
    %v133 = vadd.f32 %v119, %v131
    %134 = vrot.lane.b32.xlu0 %v47, 45
    %v135 = vpop.permute.xlu0 %134
    %136 = vrot.lane.b32.xlu0 %v48, 45
    %v137 = vpop.permute.xlu0 %136
    %vm138 = vcmp.lt.s32.totalorder %v54, 45
    %v139 = vsel %vm138, %v135, %v137
    %v140 = vsel %vm138, %v137, %v135
    %s141 = scalar_lea.vmem [#allocation5], 96
    %v142 = vld [vmem:[%s141] sm:$0xff]
    %v143 = vld [vmem:[%s141 + $0x8] sm:$0xff]
    %v144 = vmul.f32 %v140, %v142
    %v145 = vmul.f32 %v139, %v143
    %v146 = vadd.f32 %v132, %v144
    %v147 = vadd.f32 %v133, %v145
    %148 = vrot.lane.b32.xlu0 %v47, 35
    %v149 = vpop.permute.xlu0 %148
    %150 = vrot.lane.b32.xlu0 %v48, 35
    %v151 = vpop.permute.xlu0 %150
    %vm152 = vcmp.lt.s32.totalorder %v54, 35
    %v153 = vsel %vm152, %v149, %v151
    %v154 = vsel %vm152, %v151, %v149
    %s155 = scalar_lea.vmem [#allocation5], 112
    %v156 = vld [vmem:[%s155] sm:$0xff]
    %v157 = vld [vmem:[%s155 + $0x8] sm:$0xff]
    %v158 = vmul.f32 %v154, %v156
    %v159 = vmul.f32 %v153, %v157
    %v160 = vadd.f32 %v146, %v158
    %v161 = vadd.f32 %v147, %v159
    %162 = vrot.lane.b32.xlu0 %v47, 34
    %v163 = vpop.permute.xlu0 %162
    %164 = vrot.lane.b32.xlu0 %v48, 34
    %v165 = vpop.permute.xlu0 %164
    %vm166 = vcmp.lt.s32.totalorder %v54, 34
    %v167 = vsel %vm166, %v163, %v165
    %v168 = vsel %vm166, %v165, %v163
    %s169 = scalar_lea.vmem [#allocation5], 128
    %v170 = vld [vmem:[%s169] sm:$0xff]
    %v171 = vld [vmem:[%s169 + $0x8] sm:$0xff]
    %v172 = vmul.f32 %v168, %v170
    %v173 = vmul.f32 %v167, %v171
    %v174 = vadd.f32 %v160, %v172
    %v175 = vadd.f32 %v161, %v173
    %176 = vrot.lane.b32.xlu0 %v47, 33
    %v177 = vpop.permute.xlu0 %176
    %178 = vrot.lane.b32.xlu0 %v48, 33
    %v179 = vpop.permute.xlu0 %178
    %vm180 = vcmp.lt.s32.totalorder %v54, 33
    %v181 = vsel %vm180, %v177, %v179
    %v182 = vsel %vm180, %v179, %v177
    %s183 = scalar_lea.vmem [#allocation5], 144
    %v184 = vld [vmem:[%s183] sm:$0xff]
    %v185 = vld [vmem:[%s183 + $0x8] sm:$0xff]
    %v186 = vmul.f32 %v182, %v184
    %v187 = vmul.f32 %v181, %v185
    %v188 = vadd.f32 %v174, %v186
    %v189 = vadd.f32 %v175, %v187
    %190 = vrot.lane.b32.xlu0 %v47, 32
    %v191 = vpop.permute.xlu0 %190
    %192 = vrot.lane.b32.xlu0 %v48, 32
    %v193 = vpop.permute.xlu0 %192
    %vm194 = vcmp.lt.s32.totalorder %v54, 32
    %v195 = vsel %vm194, %v191, %v193
    %v196 = vsel %vm194, %v193, %v191
    %s197 = scalar_lea.vmem [#allocation5], 160
    %v198 = vld [vmem:[%s197] sm:$0xff]
    %v199 = vld [vmem:[%s197 + $0x8] sm:$0xff]
    %v200 = vmul.f32 %v196, %v198
    %v201 = vmul.f32 %v195, %v199
    %v202 = vadd.f32 %v188, %v200
    %v203 = vadd.f32 %v189, %v201
    %204 = vrot.lane.b32.xlu0 %v47, 31
    %v205 = vpop.permute.xlu0 %204
    %206 = vrot.lane.b32.xlu0 %v48, 31
    %v207 = vpop.permute.xlu0 %206
    %vm208 = vcmp.lt.s32.totalorder %v54, 31
    %v209 = vsel %vm208, %v205, %v207
    %v210 = vsel %vm208, %v207, %v205
    %s211 = scalar_lea.vmem [#allocation5], 176
    %v212 = vld [vmem:[%s211] sm:$0xff]
    %v213 = vld [vmem:[%s211 + $0x8] sm:$0xff]
    %v214 = vmul.f32 %v210, %v212
    %v215 = vmul.f32 %v209, %v213
    %v216 = vadd.f32 %v202, %v214
    %v217 = vadd.f32 %v203, %v215
    %218 = vrot.lane.b32.xlu0 %v47, 30
    %v219 = vpop.permute.xlu0 %218
    %220 = vrot.lane.b32.xlu0 %v48, 30
    %v221 = vpop.permute.xlu0 %220
    %vm222 = vcmp.lt.s32.totalorder %v54, 30
    %v223 = vsel %vm222, %v219, %v221
    %v224 = vsel %vm222, %v221, %v219
    %s225 = scalar_lea.vmem [#allocation5], 192
    %v226 = vld [vmem:[%s225] sm:$0xff]
    %v227 = vld [vmem:[%s225 + $0x8] sm:$0xff]
    %v228 = vmul.f32 %v224, %v226
    %v229 = vmul.f32 %v223, %v227
    %v230 = vadd.f32 %v216, %v228
    %v231 = vadd.f32 %v217, %v229
    %232 = vrot.lane.b32.xlu0 %v47, 29
    %v233 = vpop.permute.xlu0 %232
    %234 = vrot.lane.b32.xlu0 %v48, 29
    %v235 = vpop.permute.xlu0 %234
    %vm236 = vcmp.lt.s32.totalorder %v54, 29
    %v237 = vsel %vm236, %v233, %v235
    %v238 = vsel %vm236, %v235, %v233
    %s239 = scalar_lea.vmem [#allocation5], 208
    %v240 = vld [vmem:[%s239] sm:$0xff]
    %v241 = vld [vmem:[%s239 + $0x8] sm:$0xff]
    %v242 = vmul.f32 %v238, %v240
    %v243 = vmul.f32 %v237, %v241
    %v244 = vadd.f32 %v230, %v242
    %v245 = vadd.f32 %v231, %v243
    %246 = vrot.lane.b32.xlu0 %v47, 19
    %v247 = vpop.permute.xlu0 %246
    %248 = vrot.lane.b32.xlu0 %v48, 19
    %v249 = vpop.permute.xlu0 %248
    %vm250 = vcmp.lt.s32.totalorder %v54, 19
    %v251 = vsel %vm250, %v247, %v249
    %v252 = vsel %vm250, %v249, %v247
    %s253 = scalar_lea.vmem [#allocation5], 224
    %v254 = vld [vmem:[%s253] sm:$0xff]
    %v255 = vld [vmem:[%s253 + $0x8] sm:$0xff]
    %v256 = vmul.f32 %v252, %v254
    %v257 = vmul.f32 %v251, %v255
    %v258 = vadd.f32 %v244, %v256
    %v259 = vadd.f32 %v245, %v257
    %260 = vrot.lane.b32.xlu0 %v47, 18
    %v261 = vpop.permute.xlu0 %260
    %262 = vrot.lane.b32.xlu0 %v48, 18
    %v263 = vpop.permute.xlu0 %262
    %vm264 = vcmp.lt.s32.totalorder %v54, 18
    %v265 = vsel %vm264, %v261, %v263
    %v266 = vsel %vm264, %v263, %v261
    %s267 = scalar_lea.vmem [#allocation5], 240
    %v268 = vld [vmem:[%s267] sm:$0xff]
    %v269 = vld [vmem:[%s267 + $0x8] sm:$0xff]
    %v270 = vmul.f32 %v266, %v268
    %v271 = vmul.f32 %v265, %v269
    %v272 = vadd.f32 %v258, %v270
    %v273 = vadd.f32 %v259, %v271
    %274 = vrot.lane.b32.xlu0 %v47, 17
    %v275 = vpop.permute.xlu0 %274
    %276 = vrot.lane.b32.xlu0 %v48, 17
    %v277 = vpop.permute.xlu0 %276
    %vm278 = vcmp.lt.s32.totalorder %v54, 17
    %v279 = vsel %vm278, %v275, %v277
    %v280 = vsel %vm278, %v277, %v275
    %s281 = scalar_lea.vmem [#allocation5], 256
    %v282 = vld [vmem:[%s281] sm:$0xff]
    %v283 = vld [vmem:[%s281 + $0x8] sm:$0xff]
    %v284 = vmul.f32 %v280, %v282
    %v285 = vmul.f32 %v279, %v283
    %v286 = vadd.f32 %v272, %v284
    %v287 = vadd.f32 %v273, %v285
    %288 = vrot.lane.b32.xlu0 %v47, 16
    %v289 = vpop.permute.xlu0 %288
    %290 = vrot.lane.b32.xlu0 %v48, 16
    %v291 = vpop.permute.xlu0 %290
    %vm292 = vcmp.lt.s32.totalorder %v54, 16
    %v293 = vsel %vm292, %v289, %v291
    %v294 = vsel %vm292, %v291, %v289
    %s295 = scalar_lea.vmem [#allocation5], 272
    %v296 = vld [vmem:[%s295] sm:$0xff]
    %v297 = vld [vmem:[%s295 + $0x8] sm:$0xff]
    %v298 = vmul.f32 %v294, %v296
    %v299 = vmul.f32 %v293, %v297
    %v300 = vadd.f32 %v286, %v298
    %v301 = vadd.f32 %v287, %v299
    %302 = vrot.lane.b32.xlu0 %v47, 15
    %v303 = vpop.permute.xlu0 %302
    %304 = vrot.lane.b32.xlu0 %v48, 15
    %v305 = vpop.permute.xlu0 %304
    %vm306 = vcmp.lt.s32.totalorder %v54, 15
    %v307 = vsel %vm306, %v303, %v305
    %v308 = vsel %vm306, %v305, %v303
    %s309 = scalar_lea.vmem [#allocation5], 288
    %v310 = vld [vmem:[%s309] sm:$0xff]
    %v311 = vld [vmem:[%s309 + $0x8] sm:$0xff]
    %v312 = vmul.f32 %v308, %v310
    %v313 = vmul.f32 %v307, %v311
    %v314 = vadd.f32 %v300, %v312
    %v315 = vadd.f32 %v301, %v313
    %316 = vrot.lane.b32.xlu0 %v47, 14
    %v317 = vpop.permute.xlu0 %316
    %318 = vrot.lane.b32.xlu0 %v48, 14
    %v319 = vpop.permute.xlu0 %318
    %vm320 = vcmp.lt.s32.totalorder %v54, 14
    %v321 = vsel %vm320, %v317, %v319
    %v322 = vsel %vm320, %v319, %v317
    %s323 = scalar_lea.vmem [#allocation5], 304
    %v324 = vld [vmem:[%s323] sm:$0xff]
    %v325 = vld [vmem:[%s323 + $0x8] sm:$0xff]
    %v326 = vmul.f32 %v322, %v324
    %v327 = vmul.f32 %v321, %v325
    %v328 = vadd.f32 %v314, %v326
    %v329 = vadd.f32 %v315, %v327
    %330 = vrot.lane.b32.xlu0 %v47, 13
    %v331 = vpop.permute.xlu0 %330
    %332 = vrot.lane.b32.xlu0 %v48, 13
    %v333 = vpop.permute.xlu0 %332
    %vm334 = vcmp.lt.s32.totalorder %v54, 13
    %v335 = vsel %vm334, %v331, %v333
    %v336 = vsel %vm334, %v333, %v331
    %s337 = scalar_lea.vmem [#allocation5], 320
    %v338 = vld [vmem:[%s337] sm:$0xff]
    %v339 = vld [vmem:[%s337 + $0x8] sm:$0xff]
    %v340 = vmul.f32 %v336, %v338
    %v341 = vmul.f32 %v335, %v339
    %v342 = vadd.f32 %v328, %v340
    %v343 = vadd.f32 %v329, %v341
    %344 = vrot.lane.b32.xlu0 %v47, 3
    %v345 = vpop.permute.xlu0 %344
    %346 = vrot.lane.b32.xlu0 %v48, 3
    %v347 = vpop.permute.xlu0 %346
    %vm348 = vcmp.lt.s32.totalorder %v54, 3
    %v349 = vsel %vm348, %v345, %v347
    %v350 = vsel %vm348, %v347, %v345
    %s351 = scalar_lea.vmem [#allocation5], 336
    %v352 = vld [vmem:[%s351] sm:$0xff]
    %v353 = vld [vmem:[%s351 + $0x8] sm:$0xff]
    %v354 = vmul.f32 %v350, %v352
    %v355 = vmul.f32 %v349, %v353
    %v356 = vadd.f32 %v342, %v354
    %v357 = vadd.f32 %v343, %v355
    %358 = vrot.lane.b32.xlu0 %v47, 2
    %v359 = vpop.permute.xlu0 %358
    %360 = vrot.lane.b32.xlu0 %v48, 2
    %v361 = vpop.permute.xlu0 %360
    %vm362 = vcmp.lt.s32.totalorder %v54, 2
    %v363 = vsel %vm362, %v359, %v361
    %v364 = vsel %vm362, %v361, %v359
    %s365 = scalar_lea.vmem [#allocation5], 352
    %v366 = vld [vmem:[%s365] sm:$0xff]
    %v367 = vld [vmem:[%s365 + $0x8] sm:$0xff]
    %v368 = vmul.f32 %v364, %v366
    %v369 = vmul.f32 %v363, %v367
    %v370 = vadd.f32 %v356, %v368
    %v371 = vadd.f32 %v357, %v369
    %372 = vrot.lane.b32.xlu0 %v47, 1
    %v373 = vpop.permute.xlu0 %372
    %374 = vrot.lane.b32.xlu0 %v48, 1
    %v375 = vpop.permute.xlu0 %374
    %vm376 = vcmp.lt.s32.totalorder %v54, 1
    %v377 = vsel %vm376, %v373, %v375
    %v378 = vsel %vm376, %v375, %v373
    %s379 = scalar_lea.vmem [#allocation5], 368
    %v380 = vld [vmem:[%s379] sm:$0xff]
    %v381 = vld [vmem:[%s379 + $0x8] sm:$0xff]
    %v382 = vmul.f32 %v378, %v380
    %v383 = vmul.f32 %v377, %v381
    %v384 = vadd.f32 %v370, %v382
    %v385 = vadd.f32 %v371, %v383
    %s386 = scalar_lea.vmem [#allocation5], 384
    %v387 = vld [vmem:[%s386] sm:$0xff]
    %v388 = vld [vmem:[%s386 + $0x8] sm:$0xff]
    %v389 = vmul.f32 %v47, %v387
    %v390 = vmul.f32 %v48, %v388
    %v391 = vadd.f32 %v384, %v389
    %v392 = vadd.f32 %v385, %v390
    %393 = vrot.lane.b32.xlu0 %v47, 127
    %v394 = vpop.permute.xlu0 %393
    %395 = vrot.lane.b32.xlu0 %v48, 127
    %v396 = vpop.permute.xlu0 %395
    %vm397 = vcmp.lt.s32.totalorder %v54, 127
    %v398 = vsel %vm397, %v394, %v396
    %v399 = vsel %vm397, %v396, %v394
    %s400 = scalar_lea.vmem [#allocation5], 400
    %v401 = vld [vmem:[%s400] sm:$0xff]
    %v402 = vld [vmem:[%s400 + $0x8] sm:$0xff]
    %v403 = vmul.f32 %v398, %v401
    %v404 = vmul.f32 %v399, %v402
    %v405 = vadd.f32 %v391, %v403
    %v406 = vadd.f32 %v392, %v404
    %407 = vrot.lane.b32.xlu0 %v47, 126
    %v408 = vpop.permute.xlu0 %407
    %409 = vrot.lane.b32.xlu0 %v48, 126
    %v410 = vpop.permute.xlu0 %409
    %vm411 = vcmp.lt.s32.totalorder %v54, 126
    %v412 = vsel %vm411, %v408, %v410
    %v413 = vsel %vm411, %v410, %v408
    %s414 = scalar_lea.vmem [#allocation5], 416
    %v415 = vld [vmem:[%s414] sm:$0xff]
    %v416 = vld [vmem:[%s414 + $0x8] sm:$0xff]
    %v417 = vmul.f32 %v412, %v415
    %v418 = vmul.f32 %v413, %v416
    %v419 = vadd.f32 %v405, %v417
    %v420 = vadd.f32 %v406, %v418
    %421 = vrot.lane.b32.xlu0 %v47, 125
    %v422 = vpop.permute.xlu0 %421
    %423 = vrot.lane.b32.xlu0 %v48, 125
    %v424 = vpop.permute.xlu0 %423
    %vm425 = vcmp.lt.s32.totalorder %v54, 125
    %v426 = vsel %vm425, %v422, %v424
    %v427 = vsel %vm425, %v424, %v422
    %s428 = scalar_lea.vmem [#allocation5], 432
    %v429 = vld [vmem:[%s428] sm:$0xff]
    %v430 = vld [vmem:[%s428 + $0x8] sm:$0xff]
    %v431 = vmul.f32 %v426, %v429
    %v432 = vmul.f32 %v427, %v430
    %v433 = vadd.f32 %v419, %v431
    %v434 = vadd.f32 %v420, %v432
    %435 = vrot.lane.b32.xlu0 %v47, 115
    %v436 = vpop.permute.xlu0 %435
    %437 = vrot.lane.b32.xlu0 %v48, 115
    %v438 = vpop.permute.xlu0 %437
    %vm439 = vcmp.lt.s32.totalorder %v54, 115
    %v440 = vsel %vm439, %v436, %v438
    %v441 = vsel %vm439, %v438, %v436
    %s442 = scalar_lea.vmem [#allocation5], 448
    %v443 = vld [vmem:[%s442] sm:$0xff]
    %v444 = vld [vmem:[%s442 + $0x8] sm:$0xff]
    %v445 = vmul.f32 %v440, %v443
    %v446 = vmul.f32 %v441, %v444
    %v447 = vadd.f32 %v433, %v445
    %v448 = vadd.f32 %v434, %v446
    %449 = vrot.lane.b32.xlu0 %v47, 114
    %v450 = vpop.permute.xlu0 %449
    %451 = vrot.lane.b32.xlu0 %v48, 114
    %v452 = vpop.permute.xlu0 %451
    %vm453 = vcmp.lt.s32.totalorder %v54, 114
    %v454 = vsel %vm453, %v450, %v452
    %v455 = vsel %vm453, %v452, %v450
    %s456 = scalar_lea.vmem [#allocation5], 464
    %v457 = vld [vmem:[%s456] sm:$0xff]
    %v458 = vld [vmem:[%s456 + $0x8] sm:$0xff]
    %v459 = vmul.f32 %v454, %v457
    %v460 = vmul.f32 %v455, %v458
    %v461 = vadd.f32 %v447, %v459
    %v462 = vadd.f32 %v448, %v460
    %463 = vrot.lane.b32.xlu0 %v47, 113
    %v464 = vpop.permute.xlu0 %463
    %465 = vrot.lane.b32.xlu0 %v48, 113
    %v466 = vpop.permute.xlu0 %465
    %vm467 = vcmp.lt.s32.totalorder %v54, 113
    %v468 = vsel %vm467, %v464, %v466
    %v469 = vsel %vm467, %v466, %v464
    %s470 = scalar_lea.vmem [#allocation5], 480
    %v471 = vld [vmem:[%s470] sm:$0xff]
    %v472 = vld [vmem:[%s470 + $0x8] sm:$0xff]
    %v473 = vmul.f32 %v468, %v471
    %v474 = vmul.f32 %v469, %v472
    %v475 = vadd.f32 %v461, %v473
    %v476 = vadd.f32 %v462, %v474
    %477 = vrot.lane.b32.xlu0 %v47, 112
    %v478 = vpop.permute.xlu0 %477
    %479 = vrot.lane.b32.xlu0 %v48, 112
    %v480 = vpop.permute.xlu0 %479
    %vm481 = vcmp.lt.s32.totalorder %v54, 112
    %v482 = vsel %vm481, %v478, %v480
    %v483 = vsel %vm481, %v480, %v478
    %s484 = scalar_lea.vmem [#allocation5], 496
    %v485 = vld [vmem:[%s484] sm:$0xff]
    %v486 = vld [vmem:[%s484 + $0x8] sm:$0xff]
    %v487 = vmul.f32 %v482, %v485
    %v488 = vmul.f32 %v483, %v486
    %v489 = vadd.f32 %v475, %v487
    %v490 = vadd.f32 %v476, %v488
    %491 = vrot.lane.b32.xlu0 %v47, 111
    %v492 = vpop.permute.xlu0 %491
    %493 = vrot.lane.b32.xlu0 %v48, 111
    %v494 = vpop.permute.xlu0 %493
    %vm495 = vcmp.lt.s32.totalorder %v54, 111
    %v496 = vsel %vm495, %v492, %v494
    %v497 = vsel %vm495, %v494, %v492
    %s498 = scalar_lea.vmem [#allocation5], 512
    %v499 = vld [vmem:[%s498] sm:$0xff]
    %v500 = vld [vmem:[%s498 + $0x8] sm:$0xff]
    %v501 = vmul.f32 %v496, %v499
    %v502 = vmul.f32 %v497, %v500
    %v503 = vadd.f32 %v489, %v501
    %v504 = vadd.f32 %v490, %v502
    %505 = vrot.lane.b32.xlu0 %v47, 110
    %v506 = vpop.permute.xlu0 %505
    %507 = vrot.lane.b32.xlu0 %v48, 110
    %v508 = vpop.permute.xlu0 %507
    %vm509 = vcmp.lt.s32.totalorder %v54, 110
    %v510 = vsel %vm509, %v506, %v508
    %v511 = vsel %vm509, %v508, %v506
    %s512 = scalar_lea.vmem [#allocation5], 528
    %v513 = vld [vmem:[%s512] sm:$0xff]
    %v514 = vld [vmem:[%s512 + $0x8] sm:$0xff]
    %v515 = vmul.f32 %v510, %v513
    %v516 = vmul.f32 %v511, %v514
    %v517 = vadd.f32 %v503, %v515
    %v518 = vadd.f32 %v504, %v516
    %519 = vrot.lane.b32.xlu0 %v47, 109
    %v520 = vpop.permute.xlu0 %519
    %521 = vrot.lane.b32.xlu0 %v48, 109
    %v522 = vpop.permute.xlu0 %521
    %vm523 = vcmp.lt.s32.totalorder %v54, 109
    %v524 = vsel %vm523, %v520, %v522
    %v525 = vsel %vm523, %v522, %v520
    %s526 = scalar_lea.vmem [#allocation5], 544
    %v527 = vld [vmem:[%s526] sm:$0xff]
    %v528 = vld [vmem:[%s526 + $0x8] sm:$0xff]
    %v529 = vmul.f32 %v524, %v527
    %v530 = vmul.f32 %v525, %v528
    %v531 = vadd.f32 %v517, %v529
    %v532 = vadd.f32 %v518, %v530
    %533 = vrot.lane.b32.xlu0 %v47, 99
    %v534 = vpop.permute.xlu0 %533
    %535 = vrot.lane.b32.xlu0 %v48, 99
    %v536 = vpop.permute.xlu0 %535
    %vm537 = vcmp.lt.s32.totalorder %v54, 99
    %v538 = vsel %vm537, %v534, %v536
    %v539 = vsel %vm537, %v536, %v534
    %s540 = scalar_lea.vmem [#allocation5], 560
    %v541 = vld [vmem:[%s540] sm:$0xff]
    %v542 = vld [vmem:[%s540 + $0x8] sm:$0xff]
    %v543 = vmul.f32 %v538, %v541
    %v544 = vmul.f32 %v539, %v542
    %v545 = vadd.f32 %v531, %v543
    %v546 = vadd.f32 %v532, %v544
    %547 = vrot.lane.b32.xlu0 %v47, 98
    %v548 = vpop.permute.xlu0 %547
    %549 = vrot.lane.b32.xlu0 %v48, 98
    %v550 = vpop.permute.xlu0 %549
    %vm551 = vcmp.lt.s32.totalorder %v54, 98
    %v552 = vsel %vm551, %v548, %v550
    %v553 = vsel %vm551, %v550, %v548
    %s554 = scalar_lea.vmem [#allocation5], 576
    %v555 = vld [vmem:[%s554] sm:$0xff]
    %v556 = vld [vmem:[%s554 + $0x8] sm:$0xff]
    %v557 = vmul.f32 %v552, %v555
    %v558 = vmul.f32 %v553, %v556
    %v559 = vadd.f32 %v545, %v557
    %v560 = vadd.f32 %v546, %v558
    %561 = vrot.lane.b32.xlu0 %v47, 97
    %v562 = vpop.permute.xlu0 %561
    %563 = vrot.lane.b32.xlu0 %v48, 97
    %v564 = vpop.permute.xlu0 %563
    %vm565 = vcmp.lt.s32.totalorder %v54, 97
    %v566 = vsel %vm565, %v562, %v564
    %v567 = vsel %vm565, %v564, %v562
    %s568 = scalar_lea.vmem [#allocation5], 592
    %v569 = vld [vmem:[%s568] sm:$0xff]
    %v570 = vld [vmem:[%s568 + $0x8] sm:$0xff]
    %v571 = vmul.f32 %v566, %v569
    %v572 = vmul.f32 %v567, %v570
    %v573 = vadd.f32 %v559, %v571
    %v574 = vadd.f32 %v560, %v572
    %575 = vrot.lane.b32.xlu0 %v47, 96
    %v576 = vpop.permute.xlu0 %575
    %577 = vrot.lane.b32.xlu0 %v48, 96
    %v578 = vpop.permute.xlu0 %577
    %vm579 = vcmp.lt.s32.totalorder %v54, 96
    %v580 = vsel %vm579, %v576, %v578
    %v581 = vsel %vm579, %v578, %v576
    %s582 = scalar_lea.vmem [#allocation5], 608
    %v583 = vld [vmem:[%s582] sm:$0xff]
    %v584 = vld [vmem:[%s582 + $0x8] sm:$0xff]
    %v585 = vmul.f32 %v580, %v583
    %v586 = vmul.f32 %v581, %v584
    %v587 = vadd.f32 %v573, %v585
    %v588 = vadd.f32 %v574, %v586
    %589 = vrot.lane.b32.xlu0 %v47, 95
    %v590 = vpop.permute.xlu0 %589
    %591 = vrot.lane.b32.xlu0 %v48, 95
    %v592 = vpop.permute.xlu0 %591
    %vm593 = vcmp.lt.s32.totalorder %v54, 95
    %v594 = vsel %vm593, %v590, %v592
    %v595 = vsel %vm593, %v592, %v590
    %s596 = scalar_lea.vmem [#allocation5], 624
    %v597 = vld [vmem:[%s596] sm:$0xff]
    %v598 = vld [vmem:[%s596 + $0x8] sm:$0xff]
    %v599 = vmul.f32 %v594, %v597
    %v600 = vmul.f32 %v595, %v598
    %v601 = vadd.f32 %v587, %v599
    %v602 = vadd.f32 %v588, %v600
    %603 = vrot.lane.b32.xlu0 %v47, 94
    %v604 = vpop.permute.xlu0 %603
    %605 = vrot.lane.b32.xlu0 %v48, 94
    %v606 = vpop.permute.xlu0 %605
    %vm607 = vcmp.lt.s32.totalorder %v54, 94
    %v608 = vsel %vm607, %v604, %v606
    %v609 = vsel %vm607, %v606, %v604
    %s610 = scalar_lea.vmem [#allocation5], 640
    %v611 = vld [vmem:[%s610] sm:$0xff]
    %v612 = vld [vmem:[%s610 + $0x8] sm:$0xff]
    %v613 = vmul.f32 %v608, %v611
    %v614 = vmul.f32 %v609, %v612
    %v615 = vadd.f32 %v601, %v613
    %v616 = vadd.f32 %v602, %v614
    %617 = vrot.lane.b32.xlu0 %v47, 93
    %v618 = vpop.permute.xlu0 %617
    %619 = vrot.lane.b32.xlu0 %v48, 93
    %v620 = vpop.permute.xlu0 %619
    %vm621 = vcmp.lt.s32.totalorder %v54, 93
    %v622 = vsel %vm621, %v618, %v620
    %v623 = vsel %vm621, %v620, %v618
    %s624 = scalar_lea.vmem [#allocation5], 656
    %v625 = vld [vmem:[%s624] sm:$0xff]
    %v626 = vld [vmem:[%s624 + $0x8] sm:$0xff]
    %v627 = vmul.f32 %v622, %v625
    %v628 = vmul.f32 %v623, %v626
    %v629 = vadd.f32 %v615, %v627
    %v630 = vadd.f32 %v616, %v628
    %631 = vrot.lane.b32.xlu0 %v47, 83
    %v632 = vpop.permute.xlu0 %631
    %633 = vrot.lane.b32.xlu0 %v48, 83
    %v634 = vpop.permute.xlu0 %633
    %vm635 = vcmp.lt.s32.totalorder %v54, 83
    %v636 = vsel %vm635, %v632, %v634
    %v637 = vsel %vm635, %v634, %v632
    %s638 = scalar_lea.vmem [#allocation5], 672
    %v639 = vld [vmem:[%s638] sm:$0xff]
    %v640 = vld [vmem:[%s638 + $0x8] sm:$0xff]
    %v641 = vmul.f32 %v636, %v639
    %v642 = vmul.f32 %v637, %v640
    %v643 = vadd.f32 %v629, %v641
    %v644 = vadd.f32 %v630, %v642
    %645 = vrot.lane.b32.xlu0 %v47, 82
    %v646 = vpop.permute.xlu0 %645
    %647 = vrot.lane.b32.xlu0 %v48, 82
    %v648 = vpop.permute.xlu0 %647
    %vm649 = vcmp.lt.s32.totalorder %v54, 82
    %v650 = vsel %vm649, %v646, %v648
    %v651 = vsel %vm649, %v648, %v646
    %s652 = scalar_lea.vmem [#allocation5], 688
    %v653 = vld [vmem:[%s652] sm:$0xff]
    %v654 = vld [vmem:[%s652 + $0x8] sm:$0xff]
    %v655 = vmul.f32 %v650, %v653
    %v656 = vmul.f32 %v651, %v654
    %v657 = vadd.f32 %v643, %v655
    %v658 = vadd.f32 %v644, %v656
    %659 = vrot.lane.b32.xlu0 %v47, 81
    %v660 = vpop.permute.xlu0 %659
    %661 = vrot.lane.b32.xlu0 %v48, 81
    %v662 = vpop.permute.xlu0 %661
    %vm663 = vcmp.lt.s32.totalorder %v54, 81
    %v664 = vsel %vm663, %v660, %v662
    %v665 = vsel %vm663, %v662, %v660
    %s666 = scalar_lea.vmem [#allocation5], 704
    %v667 = vld [vmem:[%s666] sm:$0xff]
    %v668 = vld [vmem:[%s666 + $0x8] sm:$0xff]
    %v669 = vmul.f32 %v664, %v667
    %v670 = vmul.f32 %v665, %v668
    %v671 = vadd.f32 %v657, %v669
    %v672 = vadd.f32 %v658, %v670
    %673 = vrot.lane.b32.xlu0 %v47, 80
    %v674 = vpop.permute.xlu0 %673
    %675 = vrot.lane.b32.xlu0 %v48, 80
    %v676 = vpop.permute.xlu0 %675
    %vm677 = vcmp.lt.s32.totalorder %v54, 80
    %v678 = vsel %vm677, %v674, %v676
    %v679 = vsel %vm677, %v676, %v674
    %s680 = scalar_lea.vmem [#allocation5], 720
    %v681 = vld [vmem:[%s680] sm:$0xff]
    %v682 = vld [vmem:[%s680 + $0x8] sm:$0xff]
    %v683 = vmul.f32 %v678, %v681
    %v684 = vmul.f32 %v679, %v682
    %v685 = vadd.f32 %v671, %v683
    %v686 = vadd.f32 %v672, %v684
    %687 = vrot.lane.b32.xlu0 %v47, 79
    %v688 = vpop.permute.xlu0 %687
    %689 = vrot.lane.b32.xlu0 %v48, 79
    %v690 = vpop.permute.xlu0 %689
    %vm691 = vcmp.lt.s32.totalorder %v54, 79
    %v692 = vsel %vm691, %v688, %v690
    %v693 = vsel %vm691, %v690, %v688
    %s694 = scalar_lea.vmem [#allocation5], 736
    %v695 = vld [vmem:[%s694] sm:$0xff]
    %v696 = vld [vmem:[%s694 + $0x8] sm:$0xff]
    %v697 = vmul.f32 %v692, %v695
    %v698 = vmul.f32 %v693, %v696
    %v699 = vadd.f32 %v685, %v697
    %v700 = vadd.f32 %v686, %v698
    %701 = vrot.lane.b32.xlu0 %v47, 78
    %v702 = vpop.permute.xlu0 %701
    %703 = vrot.lane.b32.xlu0 %v48, 78
    %v704 = vpop.permute.xlu0 %703
    %vm705 = vcmp.lt.s32.totalorder %v54, 78
    %v706 = vsel %vm705, %v702, %v704
    %v707 = vsel %vm705, %v704, %v702
    %s708 = scalar_lea.vmem [#allocation5], 752
    %v709 = vld [vmem:[%s708] sm:$0xff]
    %v710 = vld [vmem:[%s708 + $0x8] sm:$0xff]
    %v711 = vmul.f32 %v706, %v709
    %v712 = vmul.f32 %v707, %v710
    %v713 = vadd.f32 %v699, %v711
    %v714 = vadd.f32 %v700, %v712
    %715 = vrot.lane.b32.xlu0 %v47, 77
    %v716 = vpop.permute.xlu0 %715
    %717 = vrot.lane.b32.xlu0 %v48, 77
    %v718 = vpop.permute.xlu0 %717
    %vm719 = vcmp.lt.s32.totalorder %v54, 77
    %v720 = vsel %vm719, %v716, %v718
    %v721 = vsel %vm719, %v718, %v716
    %s722 = scalar_lea.vmem [#allocation5], 768
    %v723 = vld [vmem:[%s722] sm:$0xff]
    %v724 = vld [vmem:[%s722 + $0x8] sm:$0xff]
    %v725 = vmul.f32 %v720, %v723
    %v726 = vmul.f32 %v721, %v724
    %v727 = vadd.f32 %v713, %v725
    %v728 = vadd.f32 %v714, %v726
    %v729 = vld [vmem:[%s2] sm:$0xff]
    %731 = vset.pattern.permute.xlu0 0
    %732 = vperm.xlu0 %731, %v729
    %v733 = vpop.permute.xlu0 %732
    %v735 = vadd.f32 %v727, %v733
    %v736 = vadd.f32 %v728, %v733
    %v737 = vadd.f32 %v735, %v736
    %738 = vadd.xlane.f32.xlu0 %v737
    %v739 = vpop.xlane.xlu0 %738
    %v740 = vrcp.pop 256.0
    %v741 = vmul.f32 %v739, %v740
    %v742 = vsub.f32 %v735, %v741
    %v743 = vsub.f32 %v736, %v741
    %v744 = vmul.f32 %v742, %v742
    %v745 = vmul.f32 %v743, %v743
    %v746 = vadd.f32 %v744, %v745
    %747 = vadd.xlane.f32.xlu0 %v746
    %v748 = vpop.xlane.xlu0 %747
    %v749 = vmul.f32 %v748, %v740
    %v750 = vadd.f32 %v749, 1e-05
    %v751 = vrsqrt.pop %v750
    %v752 = vmul.f32 %v742, %v751
    %v753 = vmul.f32 %v743, %v751
    %754 = vset.pattern.permute.xlu0 1
    %755 = vperm.xlu0 %754, %v729
    %v756 = vpop.permute.xlu0 %755
    %v758 = vmul.f32 %v752, %v756
    %v759 = vmul.f32 %v753, %v756
    %760 = vset.pattern.permute.xlu0 2
    %761 = vperm.xlu0 %760, %v729
    %v762 = vpop.permute.xlu0 %761
    %v764 = vadd.f32 %v758, %v762
    %v765 = vadd.f32 %v759, %v762
    %v766 = vld [vmem:[%s3] sm:$0xff]
    %v767 = vld [vmem:[%s4] sm:$0xf]
    %v768 = vld [vmem:[%s2] sm:$0xf]
    %770 = vset.pattern.permute.xlu0 0
    %771 = vperm.xlu0 %770, %v766
    %v772 = vpop.permute.xlu0 %771
    %v774 = vlaneseq
    %v775 = vshrl.u32 %v774, 7
    %v776 = vsub.s32 0, %v775
    %v777 = vrot.slane %v764, %v776
    %v778 = vlaneseq
    %v779 = vshrl.u32 %v778, 7
    %v780 = vsub.s32 0, %v779
    %v781 = vrot.slane %v765, %v780
    %v782 = vmul.f32 %v772, %v777
    %v783 = vmul.f32 %v772, %v781
    %v784 = vadd.f32 %v782, 0.0
    %v785 = vadd.f32 %v783, 0.0
    %786 = vset.pattern.permute.xlu0 1
    %787 = vperm.xlu0 %786, %v766
    %v788 = vpop.permute.xlu0 %787
    %v790 = vlaneseq
    %v791 = vshrl.u32 %v790, 7
    %v792 = vsub.s32 1, %v791
    %v793 = vrot.slane %v764, %v792
    %v794 = vlaneseq
    %v795 = vshrl.u32 %v794, 7
    %v796 = vsub.s32 1, %v795
    %v797 = vrot.slane %v765, %v796
    %v798 = vmul.f32 %v788, %v793
    %v799 = vmul.f32 %v788, %v797
    %v800 = vadd.f32 %v784, %v798
    %v801 = vadd.f32 %v785, %v799
    %802 = vset.pattern.permute.xlu0 2
    %803 = vperm.xlu0 %802, %v766
    %v804 = vpop.permute.xlu0 %803
    %v806 = vlaneseq
    %v807 = vshrl.u32 %v806, 7
    %v808 = vsub.s32 2, %v807
    %v809 = vrot.slane %v764, %v808
    %v810 = vlaneseq
    %v811 = vshrl.u32 %v810, 7
    %v812 = vsub.s32 2, %v811
    %v813 = vrot.slane %v765, %v812
    %v814 = vmul.f32 %v804, %v809
    %v815 = vmul.f32 %v804, %v813
    %v816 = vadd.f32 %v800, %v814
    %v817 = vadd.f32 %v801, %v815
    %818 = vset.pattern.permute.xlu0 3
    %819 = vperm.xlu0 %818, %v766
    %v820 = vpop.permute.xlu0 %819
    %v822 = vlaneseq
    %v823 = vshrl.u32 %v822, 7
    %v824 = vsub.s32 3, %v823
    %v825 = vrot.slane %v764, %v824
    %v826 = vlaneseq
    %v827 = vshrl.u32 %v826, 7
    %v828 = vsub.s32 3, %v827
    %v829 = vrot.slane %v765, %v828
    %v830 = vmul.f32 %v820, %v825
    %v831 = vmul.f32 %v820, %v829
    %v832 = vadd.f32 %v816, %v830
    %v833 = vadd.f32 %v817, %v831
    %834 = vset.pattern.permute.xlu0 3
    %835 = vperm.xlu0 %834, %v729
    %v836 = vpop.permute.xlu0 %835
    %v838 = vadd.f32 %v832, %v836
    %v839 = vadd.f32 %v833, %v836
    %v840 = vmul.f32 %v838, 0.70710677
    %v841 = vmul.f32 %v839, 0.70710677
    %vm842 = vcmp.ge.f32.partialorder %v840, 0.0
    %vm843 = vcmp.ge.f32.partialorder %v841, 0.0
    %v844 = vsel %vm842, 1.0, -1.0
    %v845 = vsel %vm843, 1.0, -1.0
    %v846 = vand.u32 2147483647, %v840
    %v847 = vand.u32 2147483647, %v841
    %v848 = vmul.f32 %v846, 0.3275911
    %v849 = vmul.f32 %v847, 0.3275911
    %v850 = vadd.f32 %v848, 1.0
    %v851 = vadd.f32 %v849, 1.0
    %v852 = vrcp.pop %v850
    %v853 = vmul.f32 1.0, %v852
    %v854 = vrcp.pop %v851
    %v855 = vmul.f32 1.0, %v854
    %v856 = vmul.f32 %v853, 1.0614054
    %v857 = vmul.f32 %v855, 1.0614054
    %v858 = vsub.f32 %v856, 1.4531521
    %v859 = vsub.f32 %v857, 1.4531521
    %v860 = vmul.f32 %v858, %v853
    %v861 = vmul.f32 %v859, %v855
    %v862 = vadd.f32 %v860, 1.4214138
    %v863 = vadd.f32 %v861, 1.4214138
    %v864 = vmul.f32 %v862, %v853
    %v865 = vmul.f32 %v863, %v855
    %v866 = vsub.f32 %v864, 0.28449672
    %v867 = vsub.f32 %v865, 0.28449672
    %v868 = vmul.f32 %v866, %v853
    %v869 = vmul.f32 %v867, %v855
    %v870 = vadd.f32 %v868, 0.2548296
    %v871 = vadd.f32 %v869, 0.2548296
    %v872 = vmul.f32 %v870, %v853
    %v873 = vmul.f32 %v871, %v855
    %v874 = vsub.f32 0.0, %v846
    %v875 = vsub.f32 0.0, %v847
    %v876 = vmul.f32 %v874, %v846
    %v877 = vmul.f32 %v875, %v847
    %v878 = vmul.f32 %v876, 1.442695
    %v879 = vpow.pop %v878
    %v880 = vmul.f32 %v877, 1.442695
    %v881 = vpow.pop %v880
    %v882 = vmul.f32 %v872, %v879
    %v883 = vmul.f32 %v873, %v881
    %v884 = vsub.f32 1.0, %v882
    %v885 = vsub.f32 1.0, %v883
    %v886 = vmul.f32 %v844, %v884
    %v887 = vmul.f32 %v845, %v885
    %v888 = vmul.f32 %v838, 0.5
    %v889 = vmul.f32 %v839, 0.5
    %v890 = vadd.f32 %v886, 1.0
    %v891 = vadd.f32 %v887, 1.0
    %v892 = vmul.f32 %v888, %v890
    %v893 = vmul.f32 %v889, %v891
    %v894 = vmul.f32 %v892, %v892
    %v895 = vmul.f32 %v893, %v893
    %v896 = vadd.f32 %v894, %v895
    %897 = vadd.xlane.f32.xlu0 %v896
    %v898 = vpop.xlane.xlu0 %897
    %v899 = vrsqrt.pop %v898
    %v900 = vmul.f32 %v898, %v899
    %vm901 = vcmp.eq.f32.partialorder %v898, inf
    %v902 = vsel %vm901, %v898, %v900
    %vm903 = vcmp.eq.f32.partialorder %v898, 0.0
    %v904 = vand.u32 %v898, 2147483648
    %v905 = vsel %vm903, %v904, %v902
    %v906 = vrot.slane %v905, 4
    %v907 = vadd.f32 %v905, %v906
    %v908 = vrot.slane %v907, 2
    %v909 = vadd.f32 %v907, %v908
    %v910 = vrot.slane %v909, 1
    %v911 = vadd.f32 %v909, %v910
    %v912 = vrcp.pop 8.0
    %v913 = vmul.f32 %v911, %v912
    %v914 = vadd.f32 %v913, 1e-06
    %v915 = vrcp.pop %v914
    %v916 = vmul.f32 %v905, %v915
    %v917 = vmul.f32 %v892, %v916
    %v918 = vmul.f32 %v893, %v916
    %919 = vset.pattern.permute.xlu0 4
    %920 = vperm.xlu0 %919, %v729
    %v921 = vpop.permute.xlu0 %920
    %v923 = vmul.f32 %v921, %v917
    %v924 = vmul.f32 %v921, %v918
    %925 = vset.pattern.permute.xlu0 5
    %926 = vperm.xlu0 %925, %v729
    %v927 = vpop.permute.xlu0 %926
    %v929 = vadd.f32 %v923, %v927
    %v930 = vadd.f32 %v924, %v927
    %v931 = vadd.f32 %v929, %v892
    %v932 = vadd.f32 %v930, %v893
    %934 = vset.pattern.permute.xlu0 0
    %935 = vperm.xlu0 %934, %v767
    %v936 = vpop.permute.xlu0 %935
    %v938 = vlaneseq
    %v939 = vshrl.u32 %v938, 7
    %v940 = vsub.s32 0, %v939
    %v941 = vrot.slane %v931, %v940
    %v942 = vlaneseq
    %v943 = vshrl.u32 %v942, 7
    %v944 = vsub.s32 0, %v943
    %v945 = vrot.slane %v932, %v944
    %v946 = vmul.f32 %v936, %v941
    %v947 = vmul.f32 %v936, %v945
    %v948 = vadd.f32 %v946, 0.0
    %v949 = vadd.f32 %v947, 0.0
    %950 = vset.pattern.permute.xlu0 1
    %951 = vperm.xlu0 %950, %v767
    %v952 = vpop.permute.xlu0 %951
    %v954 = vlaneseq
    %v955 = vshrl.u32 %v954, 7
    %v956 = vsub.s32 1, %v955
    %v957 = vrot.slane %v931, %v956
    %v958 = vlaneseq
    %v959 = vshrl.u32 %v958, 7
    %v960 = vsub.s32 1, %v959
    %v961 = vrot.slane %v932, %v960
    %v962 = vmul.f32 %v952, %v957
    %v963 = vmul.f32 %v952, %v961
    %v964 = vadd.f32 %v948, %v962
    %v965 = vadd.f32 %v949, %v963
    %966 = vset.pattern.permute.xlu0 2
    %967 = vperm.xlu0 %966, %v767
    %v968 = vpop.permute.xlu0 %967
    %v970 = vlaneseq
    %v971 = vshrl.u32 %v970, 7
    %v972 = vsub.s32 2, %v971
    %v973 = vrot.slane %v931, %v972
    %v974 = vlaneseq
    %v975 = vshrl.u32 %v974, 7
    %v976 = vsub.s32 2, %v975
    %v977 = vrot.slane %v932, %v976
    %v978 = vmul.f32 %v968, %v973
    %v979 = vmul.f32 %v968, %v977
    %v980 = vadd.f32 %v964, %v978
    %v981 = vadd.f32 %v965, %v979
    %982 = vset.pattern.permute.xlu0 3
    %983 = vperm.xlu0 %982, %v767
    %v984 = vpop.permute.xlu0 %983
    %v986 = vlaneseq
    %v987 = vshrl.u32 %v986, 7
    %v988 = vsub.s32 3, %v987
    %v989 = vrot.slane %v931, %v988
    %v990 = vlaneseq
    %v991 = vshrl.u32 %v990, 7
    %v992 = vsub.s32 3, %v991
    %v993 = vrot.slane %v932, %v992
    %v994 = vmul.f32 %v984, %v989
    %v995 = vmul.f32 %v984, %v993
    %v996 = vadd.f32 %v980, %v994
    %v997 = vadd.f32 %v981, %v995
    %998 = vset.pattern.permute.xlu0 4
    %999 = vperm.xlu0 %998, %v767
    %v1000 = vpop.permute.xlu0 %999
    %v1002 = vlaneseq
    %v1003 = vshrl.u32 %v1002, 7
    %v1004 = vsub.s32 4, %v1003
    %v1005 = vrot.slane %v931, %v1004
    %v1006 = vlaneseq
    %v1007 = vshrl.u32 %v1006, 7
    %v1008 = vsub.s32 4, %v1007
    %v1009 = vrot.slane %v932, %v1008
    %v1010 = vmul.f32 %v1000, %v1005
    %v1011 = vmul.f32 %v1000, %v1009
    %v1012 = vadd.f32 %v996, %v1010
    %v1013 = vadd.f32 %v997, %v1011
    %1014 = vset.pattern.permute.xlu0 5
    %1015 = vperm.xlu0 %1014, %v767
    %v1016 = vpop.permute.xlu0 %1015
    %v1018 = vlaneseq
    %v1019 = vshrl.u32 %v1018, 7
    %v1020 = vsub.s32 5, %v1019
    %v1021 = vrot.slane %v931, %v1020
    %v1022 = vlaneseq
    %v1023 = vshrl.u32 %v1022, 7
    %v1024 = vsub.s32 5, %v1023
    %v1025 = vrot.slane %v932, %v1024
    %v1026 = vmul.f32 %v1016, %v1021
    %v1027 = vmul.f32 %v1016, %v1025
    %v1028 = vadd.f32 %v1012, %v1026
    %v1029 = vadd.f32 %v1013, %v1027
    %1030 = vset.pattern.permute.xlu0 6
    %1031 = vperm.xlu0 %1030, %v767
    %v1032 = vpop.permute.xlu0 %1031
    %v1034 = vlaneseq
    %v1035 = vshrl.u32 %v1034, 7
    %v1036 = vsub.s32 6, %v1035
    %v1037 = vrot.slane %v931, %v1036
    %v1038 = vlaneseq
    %v1039 = vshrl.u32 %v1038, 7
    %v1040 = vsub.s32 6, %v1039
    %v1041 = vrot.slane %v932, %v1040
    %v1042 = vmul.f32 %v1032, %v1037
    %v1043 = vmul.f32 %v1032, %v1041
    %v1044 = vadd.f32 %v1028, %v1042
    %v1045 = vadd.f32 %v1029, %v1043
    %1046 = vset.pattern.permute.xlu0 7
    %1047 = vperm.xlu0 %1046, %v767
    %v1048 = vpop.permute.xlu0 %1047
    %v1050 = vlaneseq
    %v1051 = vshrl.u32 %v1050, 7
    %v1052 = vsub.s32 7, %v1051
    %v1053 = vrot.slane %v931, %v1052
    %v1054 = vlaneseq
    %v1055 = vshrl.u32 %v1054, 7
    %v1056 = vsub.s32 7, %v1055
    %v1057 = vrot.slane %v932, %v1056
    %v1058 = vmul.f32 %v1048, %v1053
    %v1059 = vmul.f32 %v1048, %v1057
    %v1060 = vadd.f32 %v1044, %v1058
    %v1061 = vadd.f32 %v1045, %v1059
    %1063 = vset.pattern.permute.xlu0 6
    %1064 = vperm.xlu0 %1063, %v768
    %v1065 = vpop.permute.xlu0 %1064
    %v1067 = vadd.f32 %v1060, %v1065
    %v1068 = vadd.f32 %v1061, %v1065
    %v1069 = vadd.f32 %v1067, %v47
    %v1070 = vadd.f32 %v1068, %v48
    %1071 = vst [vmem:[#allocation7] sm:$0xf] %v1069
    %1072 = vst [vmem:[#allocation7 + $0x8] sm:$0xf] %v1070
    %v1073 = vlaneseq
    %v1074 = vshrl.u32 %v1073, 7
    %v1075 = vsub.s32 4, %v1074
    %v1076 = vrot.slane %v764, %v1075
    %v1077 = vlaneseq
    %v1078 = vshrl.u32 %v1077, 7
    %v1079 = vsub.s32 4, %v1078
    %v1080 = vrot.slane %v765, %v1079
    %v1081 = vmul.f32 %v772, %v1076
    %v1082 = vmul.f32 %v772, %v1080
    %v1083 = vadd.f32 %v1081, 0.0
    %v1084 = vadd.f32 %v1082, 0.0
    %v1085 = vlaneseq
    %v1086 = vshrl.u32 %v1085, 7
    %v1087 = vsub.s32 5, %v1086
    %v1088 = vrot.slane %v764, %v1087
    %v1089 = vlaneseq
    %v1090 = vshrl.u32 %v1089, 7
    %v1091 = vsub.s32 5, %v1090
    %v1092 = vrot.slane %v765, %v1091
    %v1093 = vmul.f32 %v788, %v1088
    %v1094 = vmul.f32 %v788, %v1092
    %v1095 = vadd.f32 %v1083, %v1093
    %v1096 = vadd.f32 %v1084, %v1094
    %v1097 = vlaneseq
    %v1098 = vshrl.u32 %v1097, 7
    %v1099 = vsub.s32 6, %v1098
    %v1100 = vrot.slane %v764, %v1099
    %v1101 = vlaneseq
    %v1102 = vshrl.u32 %v1101, 7
    %v1103 = vsub.s32 6, %v1102
    %v1104 = vrot.slane %v765, %v1103
    %v1105 = vmul.f32 %v804, %v1100
    %v1106 = vmul.f32 %v804, %v1104
    %v1107 = vadd.f32 %v1095, %v1105
    %v1108 = vadd.f32 %v1096, %v1106
    %v1109 = vlaneseq
    %v1110 = vshrl.u32 %v1109, 7
    %v1111 = vsub.s32 7, %v1110
    %v1112 = vrot.slane %v764, %v1111
    %v1113 = vlaneseq
    %v1114 = vshrl.u32 %v1113, 7
    %v1115 = vsub.s32 7, %v1114
    %v1116 = vrot.slane %v765, %v1115
    %v1117 = vmul.f32 %v820, %v1112
    %v1118 = vmul.f32 %v820, %v1116
    %v1119 = vadd.f32 %v1107, %v1117
    %v1120 = vadd.f32 %v1108, %v1118
    %v1121 = vadd.f32 %v1119, %v836
    %v1122 = vadd.f32 %v1120, %v836
    %v1123 = vmul.f32 %v1121, 0.70710677
    %v1124 = vmul.f32 %v1122, 0.70710677
    %vm1125 = vcmp.ge.f32.partialorder %v1123, 0.0
    %vm1126 = vcmp.ge.f32.partialorder %v1124, 0.0
    %v1127 = vsel %vm1125, 1.0, -1.0
    %v1128 = vsel %vm1126, 1.0, -1.0
    %v1129 = vand.u32 2147483647, %v1123
    %v1130 = vand.u32 2147483647, %v1124
    %v1131 = vmul.f32 %v1129, 0.3275911
    %v1132 = vmul.f32 %v1130, 0.3275911
    %v1133 = vadd.f32 %v1131, 1.0
    %v1134 = vadd.f32 %v1132, 1.0
    %v1135 = vrcp.pop %v1133
    %v1136 = vmul.f32 1.0, %v1135
    %v1137 = vrcp.pop %v1134
    %v1138 = vmul.f32 1.0, %v1137
    %v1139 = vmul.f32 %v1136, 1.0614054
    %v1140 = vmul.f32 %v1138, 1.0614054
    %v1141 = vsub.f32 %v1139, 1.4531521
    %v1142 = vsub.f32 %v1140, 1.4531521
    %v1143 = vmul.f32 %v1141, %v1136
    %v1144 = vmul.f32 %v1142, %v1138
    %v1145 = vadd.f32 %v1143, 1.4214138
    %v1146 = vadd.f32 %v1144, 1.4214138
    %v1147 = vmul.f32 %v1145, %v1136
    %v1148 = vmul.f32 %v1146, %v1138
    %v1149 = vsub.f32 %v1147, 0.28449672
    %v1150 = vsub.f32 %v1148, 0.28449672
    %v1151 = vmul.f32 %v1149, %v1136
    %v1152 = vmul.f32 %v1150, %v1138
    %v1153 = vadd.f32 %v1151, 0.2548296
    %v1154 = vadd.f32 %v1152, 0.2548296
    %v1155 = vmul.f32 %v1153, %v1136
    %v1156 = vmul.f32 %v1154, %v1138
    %v1157 = vsub.f32 0.0, %v1129
    %v1158 = vsub.f32 0.0, %v1130
    %v1159 = vmul.f32 %v1157, %v1129
    %v1160 = vmul.f32 %v1158, %v1130
    %v1161 = vmul.f32 %v1159, 1.442695
    %v1162 = vpow.pop %v1161
    %v1163 = vmul.f32 %v1160, 1.442695
    %v1164 = vpow.pop %v1163
    %v1165 = vmul.f32 %v1155, %v1162
    %v1166 = vmul.f32 %v1156, %v1164
    %v1167 = vsub.f32 1.0, %v1165
    %v1168 = vsub.f32 1.0, %v1166
    %v1169 = vmul.f32 %v1127, %v1167
    %v1170 = vmul.f32 %v1128, %v1168
    %v1171 = vmul.f32 %v1121, 0.5
    %v1172 = vmul.f32 %v1122, 0.5
    %v1173 = vadd.f32 %v1169, 1.0
    %v1174 = vadd.f32 %v1170, 1.0
    %v1175 = vmul.f32 %v1171, %v1173
    %v1176 = vmul.f32 %v1172, %v1174
    %v1177 = vmul.f32 %v1175, %v1175
    %v1178 = vmul.f32 %v1176, %v1176
    %v1179 = vadd.f32 %v1177, %v1178
    %1180 = vadd.xlane.f32.xlu0 %v1179
    %v1181 = vpop.xlane.xlu0 %1180
    %v1182 = vrsqrt.pop %v1181
    %v1183 = vmul.f32 %v1181, %v1182
    %vm1184 = vcmp.eq.f32.partialorder %v1181, inf
    %v1185 = vsel %vm1184, %v1181, %v1183
    %vm1186 = vcmp.eq.f32.partialorder %v1181, 0.0
    %v1187 = vand.u32 %v1181, 2147483648
    %v1188 = vsel %vm1186, %v1187, %v1185
    %v1189 = vrot.slane %v1188, 4
    %v1190 = vadd.f32 %v1188, %v1189
    %v1191 = vrot.slane %v1190, 2
    %v1192 = vadd.f32 %v1190, %v1191
    %v1193 = vrot.slane %v1192, 1
    %v1194 = vadd.f32 %v1192, %v1193
    %v1195 = vmul.f32 %v1194, %v912
    %v1196 = vadd.f32 %v1195, 1e-06
    %v1197 = vrcp.pop %v1196
    %v1198 = vmul.f32 %v1188, %v1197
    %v1199 = vmul.f32 %v1175, %v1198
    %v1200 = vmul.f32 %v1176, %v1198
    %v1201 = vmul.f32 %v921, %v1199
    %v1202 = vmul.f32 %v921, %v1200
    %v1203 = vadd.f32 %v1201, %v927
    %v1204 = vadd.f32 %v1202, %v927
    %v1205 = vadd.f32 %v1203, %v1175
    %v1206 = vadd.f32 %v1204, %v1176
    %v1207 = vlaneseq
    %v1208 = vshrl.u32 %v1207, 7
    %v1209 = vsub.s32 0, %v1208
    %v1210 = vrot.slane %v1205, %v1209
    %v1211 = vlaneseq
    %v1212 = vshrl.u32 %v1211, 7
    %v1213 = vsub.s32 0, %v1212
    %v1214 = vrot.slane %v1206, %v1213
    %v1215 = vmul.f32 %v936, %v1210
    %v1216 = vmul.f32 %v936, %v1214
    %v1217 = vadd.f32 %v1215, 0.0
    %v1218 = vadd.f32 %v1216, 0.0
    %v1219 = vlaneseq
    %v1220 = vshrl.u32 %v1219, 7
    %v1221 = vsub.s32 1, %v1220
    %v1222 = vrot.slane %v1205, %v1221
    %v1223 = vlaneseq
    %v1224 = vshrl.u32 %v1223, 7
    %v1225 = vsub.s32 1, %v1224
    %v1226 = vrot.slane %v1206, %v1225
    %v1227 = vmul.f32 %v952, %v1222
    %v1228 = vmul.f32 %v952, %v1226
    %v1229 = vadd.f32 %v1217, %v1227
    %v1230 = vadd.f32 %v1218, %v1228
    %v1231 = vlaneseq
    %v1232 = vshrl.u32 %v1231, 7
    %v1233 = vsub.s32 2, %v1232
    %v1234 = vrot.slane %v1205, %v1233
    %v1235 = vlaneseq
    %v1236 = vshrl.u32 %v1235, 7
    %v1237 = vsub.s32 2, %v1236
    %v1238 = vrot.slane %v1206, %v1237
    %v1239 = vmul.f32 %v968, %v1234
    %v1240 = vmul.f32 %v968, %v1238
    %v1241 = vadd.f32 %v1229, %v1239
    %v1242 = vadd.f32 %v1230, %v1240
    %v1243 = vlaneseq
    %v1244 = vshrl.u32 %v1243, 7
    %v1245 = vsub.s32 3, %v1244
    %v1246 = vrot.slane %v1205, %v1245
    %v1247 = vlaneseq
    %v1248 = vshrl.u32 %v1247, 7
    %v1249 = vsub.s32 3, %v1248
    %v1250 = vrot.slane %v1206, %v1249
    %v1251 = vmul.f32 %v984, %v1246
    %v1252 = vmul.f32 %v984, %v1250
    %v1253 = vadd.f32 %v1241, %v1251
    %v1254 = vadd.f32 %v1242, %v1252
    %v1255 = vlaneseq
    %v1256 = vshrl.u32 %v1255, 7
    %v1257 = vsub.s32 4, %v1256
    %v1258 = vrot.slane %v1205, %v1257
    %v1259 = vlaneseq
    %v1260 = vshrl.u32 %v1259, 7
    %v1261 = vsub.s32 4, %v1260
    %v1262 = vrot.slane %v1206, %v1261
    %v1263 = vmul.f32 %v1000, %v1258
    %v1264 = vmul.f32 %v1000, %v1262
    %v1265 = vadd.f32 %v1253, %v1263
    %v1266 = vadd.f32 %v1254, %v1264
    %v1267 = vlaneseq
    %v1268 = vshrl.u32 %v1267, 7
    %v1269 = vsub.s32 5, %v1268
    %v1270 = vrot.slane %v1205, %v1269
    %v1271 = vlaneseq
    %v1272 = vshrl.u32 %v1271, 7
    %v1273 = vsub.s32 5, %v1272
    %v1274 = vrot.slane %v1206, %v1273
    %v1275 = vmul.f32 %v1016, %v1270
    %v1276 = vmul.f32 %v1016, %v1274
    %v1277 = vadd.f32 %v1265, %v1275
    %v1278 = vadd.f32 %v1266, %v1276
    %v1279 = vlaneseq
    %v1280 = vshrl.u32 %v1279, 7
    %v1281 = vsub.s32 6, %v1280
    %v1282 = vrot.slane %v1205, %v1281
    %v1283 = vlaneseq
    %v1284 = vshrl.u32 %v1283, 7
    %v1285 = vsub.s32 6, %v1284
    %v1286 = vrot.slane %v1206, %v1285
    %v1287 = vmul.f32 %v1032, %v1282
    %v1288 = vmul.f32 %v1032, %v1286
    %v1289 = vadd.f32 %v1277, %v1287
    %v1290 = vadd.f32 %v1278, %v1288
    %v1291 = vlaneseq
    %v1292 = vshrl.u32 %v1291, 7
    %v1293 = vsub.s32 7, %v1292
    %v1294 = vrot.slane %v1205, %v1293
    %v1295 = vlaneseq
    %v1296 = vshrl.u32 %v1295, 7
    %v1297 = vsub.s32 7, %v1296
    %v1298 = vrot.slane %v1206, %v1297
    %v1299 = vmul.f32 %v1048, %v1294
    %v1300 = vmul.f32 %v1048, %v1298
    %v1301 = vadd.f32 %v1289, %v1299
    %v1302 = vadd.f32 %v1290, %v1300
    %v1303 = vadd.f32 %v1301, %v1065
    %v1304 = vadd.f32 %v1302, %v1065
    %v1307 = vrot.slane %v47, 4
    %v1308 = vrot.slane %v48, 4
    %v1311 = vadd.f32 %v1303, %v1307
    %v1312 = vadd.f32 %v1304, %v1308
    %v1315 = vrot.slane %v1311, 4
    %v1316 = vrot.slane %v1312, 4
    %1319 = vst [vmem:[#allocation7] sm:$0xf0] %v1315
    %1320 = vst [vmem:[#allocation7 + $0x8] sm:$0xf0] %v1316
    // Predicated region
    $region30: #{tpu_custom_call.1} parent=1 // pred_check
      _
    $region31: #{tpu_custom_call.1} parent=1 // pred_check_branch
      %1322 = sbr.rel (0) target = $region33
    $region32: #{tpu_custom_call.1} parent=1 // pred_region
      %s1324 = ssub.s32 256, 256
      %1325 = vsyncadd [#allocation4], %s1324
      %s1327 = sshll.u32 [#allocation7], 4
      %s1328 = int_to_ptr.vmem [resolvable:$true] %s1327
      %1330 = dma.vmem_to_hbm [thread:$0]  %s1328, 256, %s5, [#allocation4]
    $region33: #{tpu_custom_call.1} parent=1 // pred_fallthru
      _
    // Predicated region
    $region34: #{tpu_custom_call.1} parent=1 // pred_check
      _
    $region35: #{tpu_custom_call.1} parent=1 // pred_check_branch
      %1332 = sbr.rel (0) target = $region37
    $region36: #{tpu_custom_call.1} parent=1 // pred_region
      %1333 = dma.done [#allocation4], 256
    $region37: #{tpu_custom_call.1} parent=1 // pred_fallthru
      _
    %1334 = vsyncpa [#allocation3], 1
    %1335 = vsyncpa [#allocation6], 1
    %1336 = vsyncpa [#allocation4], 1

</llo_original>
